<compile_context>
chip_gen: v7x
topology: tpu7x:2x2x1
jax: 0.10.0
libtpu: 0.0.40
codegen_flags: <defaults>
</compile_context>

<pallas_src>
import jax
import jax.numpy as jnp
from jax.experimental import pallas as pl
from jax.experimental.pallas import tpu as pltpu


def head_kernel(x_ref, w1_ref, b1_ref, w2_ref, b2_ref, o_ref):
    # x_ref : (tb, 1024)  f32/bf16 -- CLS hidden vectors for this batch tile
    # w1_ref: (1024, 512) bf16       b1_ref: (1, 512) f32
    # w2_ref: (512, 128)  bf16       b2_ref: (1, 128) f32 (padded cols = -1e30)
    # o_ref : (tb, 128)   f32        (padded cols hold exactly 0.0)
    x = x_ref[...]
    if x.dtype != jnp.bfloat16:
        x = x.astype(jnp.bfloat16)

    # linear1 + ReLU  (bf16 MXU inputs, f32 accumulation)
    h = jnp.dot(x, w1_ref[...], preferred_element_type=jnp.float32) + b1_ref[...]
    h = jnp.maximum(h, 0.0)

    # dropout(p=0.3) -> identity at inference time

    # linear2 (class dim padded to 128 -> lane-dense, MXU N-aligned)
    logits = (
        jnp.dot(h.astype(jnp.bfloat16), w2_ref[...],
                preferred_element_type=jnp.float32)
        + b2_ref[...]
    )

    # exp(log_softmax(logits)) == softmax(logits), computed stably.
    # Padded logits are -1e30 -> exp underflows to exactly 0, denom unchanged.
    m = jnp.max(logits, axis=-1, keepdims=True)
    e = jnp.exp(logits - m)
    denom = jnp.sum(e, axis=-1, keepdims=True)
    o_ref[...] = (e / denom).astype(o_ref.dtype)


def _resident_spec(shape):
    # Constant block index -> fetched once, VMEM-resident across all grid
    # steps.  Buffered(1) drops the unused second pipeline buffer.
    try:
        return pl.BlockSpec(shape, lambda i: (0, 0),
                            pipeline_mode=pl.Buffered(1))
    except TypeError:
        # Older JAX without pipeline_mode: fall back to default buffering.
        return pl.BlockSpec(shape, lambda i: (0, 0))


def custom_model_forward(last_hidden_state, w1, b1, w2, b2, *, block_b=1024):
    """last_hidden_state: [B, S, H] (f32 or bf16); w1/w2 bf16, b1/b2 f32.

    Returns [B, n_class] softmax probabilities (f32), matching
    torch.exp(F.log_softmax(linear2(relu(linear1(cls))), dim=1)).

    block_b: rows per grid step when B is large.  Keep it a multiple of 256
    (MXU occupancy on v6e/v7x); 1024-2048 is a good choice on v7x, <=512 is
    fine on v5e (the explicit vmem_limit below keeps any of these legal).
    """
    B, S, H = last_hidden_state.shape
    mid = w1.shape[1]
    n_class = w2.shape[1]

    # --- lane-dense class dimension (4 -> 128) -------------------------------
    n_pad = ((n_class + 127) // 128) * 128
    if n_pad != n_class:
        w2p = jnp.pad(w2, ((0, 0), (0, n_pad - n_class)))                # zeros
        b2p = jnp.pad(b2.astype(jnp.float32),
                      ((0, 0), (0, n_pad - n_class)),
                      constant_values=-1e30)                             # exp -> 0
    else:
        w2p, b2p = w2, b2.astype(jnp.float32)

    # --- CLS extraction fused into the kernel DMA ----------------------------
    # Metadata-only reshape [B, S, H] -> [B, S*H]; column block 0 of width H is
    # exactly the CLS hidden vector of every batch row, selected by the x
    # BlockSpec index_map (no separate XLA slice, no extra HBM round trip).
    x2d = last_hidden_state.reshape(B, S * H)

    # --- batch tile -----------------------------------------------------------
    # Whole batch in a single grid step when it fits; otherwise block_b rows
    # per step (weights stay resident, only x/out are streamed).
    tb = B if B <= block_b else block_b
    grid = (pl.cdiv(B, tb),)
    # NOTE: when B % tb != 0 the trailing padding rows of the last tile hold
    # undefined data; their softmax rows are discarded by the masked writeback.

    # --- explicit VMEM budget --------------------------------------------------
    x_bytes = tb * H * x2d.dtype.itemsize
    out_bytes = tb * n_pad * 4
    w_bytes = (w1.size * w1.dtype.itemsize + w2p.size * w2p.dtype.itemsize
               + (b1.size + b2p.size) * 4)
    scratch_bytes = tb * (mid + n_pad) * 4            # h + logits intermediates
    vmem_need = 2 * x_bytes + 2 * out_bytes + w_bytes + scratch_bytes
    # Cap at 48 MiB: safe on every generation (v7x physical VMEM is 64 MiB).
    vmem_limit = int(min(max(vmem_need + (8 << 20), 32 << 20), 48 << 20))

    flops = 2 * B * (H * mid + mid * n_pad)
    bytes_accessed = B * H * x2d.dtype.itemsize + w_bytes + B * n_pad * 4

    out_padded = pl.pallas_call(
        head_kernel,
        out_shape=jax.ShapeDtypeStruct((B, n_pad), jnp.float32),
        grid_spec=pltpu.PrefetchScalarGridSpec(
            num_scalar_prefetch=0,
            grid=grid,
            in_specs=[
                # Streamed: one tb-row slab of CLS vectors per grid step.
                pl.BlockSpec((tb, H), lambda i: (i, 0)),
                # Resident: constant block index, single-buffered.
                _resident_spec(w1.shape),
                _resident_spec(b1.shape),
                _resident_spec(w2p.shape),
                _resident_spec(b2p.shape),
            ],
            out_specs=pl.BlockSpec((tb, n_pad), lambda i: (i, 0)),
        ),
        compiler_params=pltpu.CompilerParams(
            # Batch-tile axis is independent -> shard across v7x's 2 TCs.
            dimension_semantics=("parallel",),
            vmem_limit_bytes=vmem_limit,
        ),
        cost_estimate=pl.CostEstimate(
            flops=flops,
            transcendentals=B * n_pad,          # the exp() in softmax
            bytes_accessed=bytes_accessed,
        ),
    )(x2d, w1, b1, w2p, b2p)

    # Back to the module's n_class-wide probabilities.
    return out_padded[:, :n_class]


if __name__ == "__main__":
    key = jax.random.PRNGKey(0)
    k_hs, k_w1, k_b1, k_w2, k_b2 = jax.random.split(key, 5)

    B, S, H, MID, N_CLASS = 16, 8, 1024, 512, 4

    # Synthetic "encoder output" (stand-in for bertweet-large last_hidden_state),
    # cached in bf16: halves the dominant x HBM stream vs an f32 hidden state.
    last_hidden_state = jax.random.normal(
        k_hs, (B, S, H), dtype=jnp.float32).astype(jnp.bfloat16)

    # Deterministic parameters: Linear(1024, 512) and Linear(512, 4).
    # Weights live in HBM as bf16 (MXU-native); biases stay f32.
    w1 = (jax.random.normal(k_w1, (H, MID), dtype=jnp.float32)
          * (1.0 / jnp.sqrt(H))).astype(jnp.bfloat16)
    b1 = jax.random.normal(k_b1, (1, MID), dtype=jnp.float32) * 0.01
    w2 = (jax.random.normal(k_w2, (MID, N_CLASS), dtype=jnp.float32)
          * (1.0 / jnp.sqrt(MID))).astype(jnp.bfloat16)
    b2 = jax.random.normal(k_b2, (1, N_CLASS), dtype=jnp.float32) * 0.01

    # Small batch -> tb = B, single grid step (no per-step overhead paid twice).
    out = custom_model_forward(last_hidden_state, w1, b1, w2, b2)
    out = jax.block_until_ready(out)

    # Reference in plain JAX with matching bf16 matmul inputs / f32 accumulation.
    cls = last_hidden_state[:, 0, :].reshape(-1, H)
    h_ref = jnp.maximum(
        jnp.dot(cls, w1, preferred_element_type=jnp.float32) + b1, 0.0)
    logits_ref = (
        jnp.dot(h_ref.astype(jnp.bfloat16), w2,
                preferred_element_type=jnp.float32) + b2)
    ref = jnp.exp(jax.nn.log_softmax(logits_ref, axis=1))

    assert out.shape == (B, N_CLASS)
    assert jnp.allclose(out, ref, atol=2e-3, rtol=2e-3), "mismatch vs reference"

    print("KERNEL_OK")
</pallas_src>

<mosaic_0001>
module attributes {stable_mosaic.version = 11 : i64} {
  func.func @head_kernel(%arg0: i32, %arg1: memref<16x1024xbf16, #tpu.memory_space<vmem>>, %arg2: memref<1024x512xbf16, #tpu.memory_space<vmem>>, %arg3: memref<1x512xf32, #tpu.memory_space<vmem>>, %arg4: memref<512x128xbf16, #tpu.memory_space<vmem>>, %arg5: memref<1x128xf32, #tpu.memory_space<vmem>>, %arg6: memref<16x128xf32, #tpu.memory_space<vmem>>) attributes {dimension_semantics = [#tpu.dimension_semantics<parallel>], iteration_bounds = array<i64: 1>, scalar_prefetch = 0 : i64, scratch_operands = 0 : i64, tpu.core_type = #tpu.core_type<tc>, window_params = [{transform_indices = @transform_0, window_bounds = array<i64: 16, 1024>}, {pipeline_mode = #tpu.pipeline_mode<synchronous>, transform_indices = @transform_1, window_bounds = array<i64: 1024, 512>}, {pipeline_mode = #tpu.pipeline_mode<synchronous>, transform_indices = @transform_2, window_bounds = array<i64: 1, 512>}, {pipeline_mode = #tpu.pipeline_mode<synchronous>, transform_indices = @transform_3, window_bounds = array<i64: 512, 128>}, {pipeline_mode = #tpu.pipeline_mode<synchronous>, transform_indices = @transform_4, window_bounds = array<i64: 1, 128>}, {transform_indices = @transform_5, window_bounds = array<i64: 16, 128>}]} {
    %c0 = arith.constant 0 : index
    %c0_0 = arith.constant 0 : index
    %0 = vector.load %arg1[%c0, %c0_0] : memref<16x1024xbf16, #tpu.memory_space<vmem>>, vector<16x1024xbf16>
    %c0_1 = arith.constant 0 : index
    %c0_2 = arith.constant 0 : index
    %1 = vector.load %arg2[%c0_1, %c0_2] : memref<1024x512xbf16, #tpu.memory_space<vmem>>, vector<1024x512xbf16>
    %cst = arith.constant dense<0.000000e+00> : vector<16x512xf32>
    %2 = tpu.matmul %0, %1, %cst {dimension_numbers = #tpu.dot_dimension_numbers<[1], [0], [0], [1], [0, 0, 1, 1], [], []>} : vector<16x1024xbf16>, vector<1024x512xbf16>, vector<16x512xf32> -> vector<16x512xf32>
    %c0_3 = arith.constant 0 : index
    %c0_4 = arith.constant 0 : index
    %3 = vector.load %arg3[%c0_3, %c0_4] : memref<1x512xf32, #tpu.memory_space<vmem>>, vector<1x512xf32>
    %4 = vector.broadcast %3 : vector<1x512xf32> to vector<16x512xf32>
    %5 = arith.addf %2, %4 : vector<16x512xf32>
    %cst_5 = arith.constant 0.000000e+00 : f32
    %6 = vector.broadcast %cst_5 : f32 to vector<16x512xf32>
    %7 = arith.maximumf %5, %6 : vector<16x512xf32>
    %8 = arith.truncf %7 : vector<16x512xf32> to vector<16x512xbf16>
    %c0_6 = arith.constant 0 : index
    %c0_7 = arith.constant 0 : index
    %9 = vector.load %arg4[%c0_6, %c0_7] : memref<512x128xbf16, #tpu.memory_space<vmem>>, vector<512x128xbf16>
    %cst_8 = arith.constant dense<0.000000e+00> : vector<16x128xf32>
    %10 = tpu.matmul %8, %9, %cst_8 {dimension_numbers = #tpu.dot_dimension_numbers<[1], [0], [0], [1], [0, 0, 1, 1], [], []>} : vector<16x512xbf16>, vector<512x128xbf16>, vector<16x128xf32> -> vector<16x128xf32>
    %c0_9 = arith.constant 0 : index
    %c0_10 = arith.constant 0 : index
    %11 = vector.load %arg5[%c0_9, %c0_10] : memref<1x128xf32, #tpu.memory_space<vmem>>, vector<1x128xf32>
    %12 = vector.broadcast %11 : vector<1x128xf32> to vector<16x128xf32>
    %13 = arith.addf %10, %12 : vector<16x128xf32>
    %cst_11 = arith.constant dense<0xFF800000> : vector<16xf32>
    %14 = vector.multi_reduction <maximumf>, %13, %cst_11 [1] : vector<16x128xf32> to vector<16xf32>
    %15 = vector.shape_cast %14 : vector<16xf32> to vector<16x1xf32>
    %16 = vector.broadcast %15 : vector<16x1xf32> to vector<16x128xf32>
    %17 = arith.subf %13, %16 : vector<16x128xf32>
    %18 = math.exp %17 : vector<16x128xf32>
    %cst_12 = arith.constant dense<0.000000e+00> : vector<16xf32>
    %19 = vector.multi_reduction <add>, %18, %cst_12 [1] : vector<16x128xf32> to vector<16xf32>
    %20 = vector.shape_cast %19 : vector<16xf32> to vector<16x1xf32>
    %21 = vector.broadcast %20 : vector<16x1xf32> to vector<16x128xf32>
    %22 = arith.divf %18, %21 : vector<16x128xf32>
    %c0_13 = arith.constant 0 : index
    %c0_14 = arith.constant 0 : index
    %23 = vector.load %arg6[%c0_13, %c0_14] : memref<16x128xf32, #tpu.memory_space<vmem>>, vector<16x128xf32>
    tpu.vector_store %arg6[%c0_13, %c0_14], %22 {strides = array<i32>} : memref<16x128xf32, #tpu.memory_space<vmem>>, vector<16x128xf32>,
    return
  }
  func.func @transform_0(%arg0: i32) -> (i32, i32) {
    %c0_i32 = arith.constant 0 : i32
    %c0_i32_0 = arith.constant 0 : i32
    return %arg0, %c0_i32 : i32, i32
  }
  func.func @transform_1(%arg0: i32) -> (i32, i32) {
    %c0_i32 = arith.constant 0 : i32
    %c0_i32_0 = arith.constant 0 : i32
    %c0_i32_1 = arith.constant 0 : i32
    return %c0_i32, %c0_i32_0 : i32, i32
  }
  func.func @transform_2(%arg0: i32) -> (i32, i32) {
    %c0_i32 = arith.constant 0 : i32
    %c0_i32_0 = arith.constant 0 : i32
    %c0_i32_1 = arith.constant 0 : i32
    return %c0_i32, %c0_i32_0 : i32, i32
  }
  func.func @transform_3(%arg0: i32) -> (i32, i32) {
    %c0_i32 = arith.constant 0 : i32
    %c0_i32_0 = arith.constant 0 : i32
    %c0_i32_1 = arith.constant 0 : i32
    return %c0_i32, %c0_i32_0 : i32, i32
  }
  func.func @transform_4(%arg0: i32) -> (i32, i32) {
    %c0_i32 = arith.constant 0 : i32
    %c0_i32_0 = arith.constant 0 : i32
    %c0_i32_1 = arith.constant 0 : i32
    return %c0_i32, %c0_i32_0 : i32, i32
  }
  func.func @transform_5(%arg0: i32) -> (i32, i32) {
    %c0_i32 = arith.constant 0 : i32
    %c0_i32_0 = arith.constant 0 : i32
    return %arg0, %c0_i32 : i32, i32
  }
}

</mosaic_0001>

<llo_original>
// kernel: tpu_custom_call.1
$region0: #{tpu_custom_call.1}
  #allocation0 [shape = 'u32[]', space=smem, size = 0x4, offset = 0x4, fixed_abs, tag = 'smem constant byte address 0x4 - core index']
  #allocation1 [shape = 'u32[144,128]{1,0:T(1,128)}', space=vmem, size = 0x12000, scoped, tag = 'internal scratch']
  %s0 = inlined_call_operand.hbm [shape: bf16[16,8192], index: 0, kind: input, shape index: {}]
  %s1 = inlined_call_operand.hbm [shape: bf16[1024,512], index: 1, kind: input, shape index: {}]
  %s2 = inlined_call_operand.vmem [shape: f32[1,512], index: 2, kind: input, shape index: {}]
  %s3 = inlined_call_operand.hbm [shape: bf16[512,128], index: 3, kind: input, shape index: {}]
  %s4 = inlined_call_operand.vmem [shape: f32[1,128], index: 4, kind: input, shape index: {}]
  %s5 = inlined_call_operand.hbm [shape: f32[16,128], index: 5, kind: output, shape index: {}]
  %s6 = sld [smem:[#allocation0]]
  $region42: #{tpu_custom_call.1} parent=0
    _
  %s8 = ssub.s32 1, %s6
  %s9 = scalar_select 0, %s8, %s6
  $region1: #{tpu_custom_call.1} parent=0
    #allocation2 [shape = 'u8[32768]{0}', space=vmem, size = 0x8000, scoped, tag = 'input window, operand 0, single buffered']
    #allocation3 [shape = 's32[1]{0}', space=sflag, size = 0x4, scoped, tag = 'scoped memory for tpu_custom_call.1']
    #allocation4 [shape = 's32[1]{0}', space=sflag, size = 0x4, scoped, tag = 'scoped memory for tpu_custom_call.1']
    #allocation5 [shape = 'u8[1048576]{0}', space=vmem, size = 0x100000, scoped, tag = 'input window, operand 1, single buffered']
    #allocation6 [shape = 's32[1]{0}', space=sflag, size = 0x4, scoped, tag = 'scoped memory for tpu_custom_call.1']
    #allocation7 [shape = 'u8[131072]{0}', space=vmem, size = 0x20000, scoped, tag = 'input window, operand 3, single buffered']
    #allocation8 [shape = 'u8[8192]{0}', space=vmem, size = 0x2000, scoped, tag = 'output window, operand 0, single buffered']
    %10 = vsyncpa [#allocation3], 0
    %11 = vsyncpa [#allocation6], 0
    %12 = vsyncpa [#allocation4], 0
    // Predicated region
    $region2: #{tpu_custom_call.1} parent=1 // pred_check
      _
    $region3: #{tpu_custom_call.1} parent=1 // pred_check_branch
      %14 = sbr.rel (0) target = $region5
    $region4: #{tpu_custom_call.1} parent=1 // pred_region
      %s16 = ssub.s32 1024, 1024
      %17 = vsyncadd [#allocation3], %s16
      %s18 = sshll.u32 [#allocation2], 4
      %s19 = int_to_ptr.vmem [resolvable:$true] %s18
      %24 = dma.hbm_to_vmem [thread:$0]  %s0, 1024, %s19, [#allocation3], 4096, 512, 32
    $region5: #{tpu_custom_call.1} parent=1 // pred_fallthru
      _
    // Predicated region
    $region6: #{tpu_custom_call.1} parent=1 // pred_check
      _
    $region7: #{tpu_custom_call.1} parent=1 // pred_check_branch
      %26 = sbr.rel (0) target = $region9
    $region8: #{tpu_custom_call.1} parent=1 // pred_region
      %s28 = ssub.s32 32768, 32768
      %29 = vsyncadd [#allocation6], %s28
      %s30 = sshll.u32 [#allocation5], 4
      %s31 = int_to_ptr.vmem [resolvable:$true] %s30
      %36 = dma.hbm_to_vmem [thread:$0]  %s1, 32768, %s31, [#allocation6], 256, 256, 16
    $region9: #{tpu_custom_call.1} parent=1 // pred_fallthru
      _
    // Predicated region
    $region10: #{tpu_custom_call.1} parent=1 // pred_check
      _
    $region11: #{tpu_custom_call.1} parent=1 // pred_check_branch
      %38 = sbr.rel (0) target = $region13
    $region12: #{tpu_custom_call.1} parent=1 // pred_region
      _
    $region13: #{tpu_custom_call.1} parent=1 // pred_fallthru
      _
    // Predicated region
    $region14: #{tpu_custom_call.1} parent=1 // pred_check
      _
    $region15: #{tpu_custom_call.1} parent=1 // pred_check_branch
      %40 = sbr.rel (0) target = $region17
    $region16: #{tpu_custom_call.1} parent=1 // pred_region
      %s42 = ssub.s32 4096, 4096
      %43 = vsyncadd [#allocation6], %s42
      %s44 = sshll.u32 [#allocation7], 4
      %s45 = int_to_ptr.vmem [resolvable:$true] %s44
      %50 = dma.hbm_to_vmem [thread:$0]  %s3, 4096, %s45, [#allocation6], 64, 64, 4
    $region17: #{tpu_custom_call.1} parent=1 // pred_fallthru
      _
    // Predicated region
    $region18: #{tpu_custom_call.1} parent=1 // pred_check
      _
    $region19: #{tpu_custom_call.1} parent=1 // pred_check_branch
      %52 = sbr.rel (0) target = $region21
    $region20: #{tpu_custom_call.1} parent=1 // pred_region
      _
    $region21: #{tpu_custom_call.1} parent=1 // pred_fallthru
      _
    // Predicated region
    $region22: #{tpu_custom_call.1} parent=1 // pred_check
      _
    $region23: #{tpu_custom_call.1} parent=1 // pred_check_branch
      %54 = sbr.rel (0) target = $region25
    $region24: #{tpu_custom_call.1} parent=1 // pred_region
      %55 = dma.done [#allocation3], 1024
    $region25: #{tpu_custom_call.1} parent=1 // pred_fallthru
      _
    // Predicated region
    $region26: #{tpu_custom_call.1} parent=1 // pred_check
      _
    $region27: #{tpu_custom_call.1} parent=1 // pred_check_branch
      %57 = sbr.rel (0) target = $region29
    $region28: #{tpu_custom_call.1} parent=1 // pred_region
      %58 = dma.done [#allocation6], 32768
    $region29: #{tpu_custom_call.1} parent=1 // pred_fallthru
      _
    // Predicated region
    $region30: #{tpu_custom_call.1} parent=1 // pred_check
      _
    $region31: #{tpu_custom_call.1} parent=1 // pred_check_branch
      %60 = sbr.rel (0) target = $region33
    $region32: #{tpu_custom_call.1} parent=1 // pred_region
      %61 = dma.done [#allocation6], 4096
    $region33: #{tpu_custom_call.1} parent=1 // pred_fallthru
      _
    %v63 = vld [vmem:[#allocation2] sm:$0xff]
    %v64 = vld [vmem:[#allocation2 + $0x8] sm:$0xff]
    %v65 = vld [vmem:[#allocation2 + $0x10] sm:$0xff]
    %v66 = vld [vmem:[#allocation2 + $0x18] sm:$0xff]
    %v67 = vld [vmem:[#allocation2 + $0x20] sm:$0xff]
    %v68 = vld [vmem:[#allocation2 + $0x28] sm:$0xff]
    %v69 = vld [vmem:[#allocation2 + $0x30] sm:$0xff]
    %v70 = vld [vmem:[#allocation2 + $0x38] sm:$0xff]
    %v71 = vld [vmem:[#allocation5] sm:$0xff]
    %v72 = vld [vmem:[#allocation5 + $0x8] sm:$0xff]
    %v73 = vld [vmem:[#allocation5 + $0x10] sm:$0xff]
    %v74 = vld [vmem:[#allocation5 + $0x18] sm:$0xff]
    %v75 = vld [vmem:[#allocation5 + $0x20] sm:$0xff]
    %v76 = vld [vmem:[#allocation5 + $0x28] sm:$0xff]
    %v77 = vld [vmem:[#allocation5 + $0x30] sm:$0xff]
    %v78 = vld [vmem:[#allocation5 + $0x38] sm:$0xff]
    %v79 = vld [vmem:[#allocation5 + $0x40] sm:$0xff]
    %v80 = vld [vmem:[#allocation5 + $0x48] sm:$0xff]
    %v81 = vld [vmem:[#allocation5 + $0x50] sm:$0xff]
    %v82 = vld [vmem:[#allocation5 + $0x58] sm:$0xff]
    %v83 = vld [vmem:[#allocation5 + $0x60] sm:$0xff]
    %v84 = vld [vmem:[#allocation5 + $0x68] sm:$0xff]
    %v85 = vld [vmem:[#allocation5 + $0x70] sm:$0xff]
    %v86 = vld [vmem:[#allocation5 + $0x78] sm:$0xff]
    %v87 = vld [vmem:[#allocation5 + $0x80] sm:$0xff]
    %v88 = vld [vmem:[#allocation5 + $0x88] sm:$0xff]
    %v89 = vld [vmem:[#allocation5 + $0x90] sm:$0xff]
    %v90 = vld [vmem:[#allocation5 + $0x98] sm:$0xff]
    %v91 = vld [vmem:[#allocation5 + $0xa0] sm:$0xff]
    %v92 = vld [vmem:[#allocation5 + $0xa8] sm:$0xff]
    %v93 = vld [vmem:[#allocation5 + $0xb0] sm:$0xff]
    %v94 = vld [vmem:[#allocation5 + $0xb8] sm:$0xff]
    %v95 = vld [vmem:[#allocation5 + $0xc0] sm:$0xff]
    %v96 = vld [vmem:[#allocation5 + $0xc8] sm:$0xff]
    %v97 = vld [vmem:[#allocation5 + $0xd0] sm:$0xff]
    %v98 = vld [vmem:[#allocation5 + $0xd8] sm:$0xff]
    %v99 = vld [vmem:[#allocation5 + $0xe0] sm:$0xff]
    %v100 = vld [vmem:[#allocation5 + $0xe8] sm:$0xff]
    %v101 = vld [vmem:[#allocation5 + $0xf0] sm:$0xff]
    %v102 = vld [vmem:[#allocation5 + $0xf8] sm:$0xff]
    %v103 = vld [vmem:[#allocation5 + $0x100] sm:$0xff]
    %v104 = vld [vmem:[#allocation5 + $0x108] sm:$0xff]
    %v105 = vld [vmem:[#allocation5 + $0x110] sm:$0xff]
    %v106 = vld [vmem:[#allocation5 + $0x118] sm:$0xff]
    %v107 = vld [vmem:[#allocation5 + $0x120] sm:$0xff]
    %v108 = vld [vmem:[#allocation5 + $0x128] sm:$0xff]
    %v109 = vld [vmem:[#allocation5 + $0x130] sm:$0xff]
    %v110 = vld [vmem:[#allocation5 + $0x138] sm:$0xff]
    %v111 = vld [vmem:[#allocation5 + $0x140] sm:$0xff]
    %v112 = vld [vmem:[#allocation5 + $0x148] sm:$0xff]
    %v113 = vld [vmem:[#allocation5 + $0x150] sm:$0xff]
    %v114 = vld [vmem:[#allocation5 + $0x158] sm:$0xff]
    %v115 = vld [vmem:[#allocation5 + $0x160] sm:$0xff]
    %v116 = vld [vmem:[#allocation5 + $0x168] sm:$0xff]
    %v117 = vld [vmem:[#allocation5 + $0x170] sm:$0xff]
    %v118 = vld [vmem:[#allocation5 + $0x178] sm:$0xff]
    %v119 = vld [vmem:[#allocation5 + $0x180] sm:$0xff]
    %v120 = vld [vmem:[#allocation5 + $0x188] sm:$0xff]
    %v121 = vld [vmem:[#allocation5 + $0x190] sm:$0xff]
    %v122 = vld [vmem:[#allocation5 + $0x198] sm:$0xff]
    %v123 = vld [vmem:[#allocation5 + $0x1a0] sm:$0xff]
    %v124 = vld [vmem:[#allocation5 + $0x1a8] sm:$0xff]
    %v125 = vld [vmem:[#allocation5 + $0x1b0] sm:$0xff]
    %v126 = vld [vmem:[#allocation5 + $0x1b8] sm:$0xff]
    %v127 = vld [vmem:[#allocation5 + $0x1c0] sm:$0xff]
    %v128 = vld [vmem:[#allocation5 + $0x1c8] sm:$0xff]
    %v129 = vld [vmem:[#allocation5 + $0x1d0] sm:$0xff]
    %v130 = vld [vmem:[#allocation5 + $0x1d8] sm:$0xff]
    %v131 = vld [vmem:[#allocation5 + $0x1e0] sm:$0xff]
    %v132 = vld [vmem:[#allocation5 + $0x1e8] sm:$0xff]
    %v133 = vld [vmem:[#allocation5 + $0x1f0] sm:$0xff]
    %v134 = vld [vmem:[#allocation5 + $0x1f8] sm:$0xff]
    %v135 = vld [vmem:[#allocation5 + $0x200] sm:$0xff]
    %v136 = vld [vmem:[#allocation5 + $0x208] sm:$0xff]
    %v137 = vld [vmem:[#allocation5 + $0x210] sm:$0xff]
    %v138 = vld [vmem:[#allocation5 + $0x218] sm:$0xff]
    %v139 = vld [vmem:[#allocation5 + $0x220] sm:$0xff]
    %v140 = vld [vmem:[#allocation5 + $0x228] sm:$0xff]
    %v141 = vld [vmem:[#allocation5 + $0x230] sm:$0xff]
    %v142 = vld [vmem:[#allocation5 + $0x238] sm:$0xff]
    %v143 = vld [vmem:[#allocation5 + $0x240] sm:$0xff]
    %v144 = vld [vmem:[#allocation5 + $0x248] sm:$0xff]
    %v145 = vld [vmem:[#allocation5 + $0x250] sm:$0xff]
    %v146 = vld [vmem:[#allocation5 + $0x258] sm:$0xff]
    %v147 = vld [vmem:[#allocation5 + $0x260] sm:$0xff]
    %v148 = vld [vmem:[#allocation5 + $0x268] sm:$0xff]
    %v149 = vld [vmem:[#allocation5 + $0x270] sm:$0xff]
    %v150 = vld [vmem:[#allocation5 + $0x278] sm:$0xff]
    %v151 = vld [vmem:[#allocation5 + $0x280] sm:$0xff]
    %v152 = vld [vmem:[#allocation5 + $0x288] sm:$0xff]
    %v153 = vld [vmem:[#allocation5 + $0x290] sm:$0xff]
    %v154 = vld [vmem:[#allocation5 + $0x298] sm:$0xff]
    %v155 = vld [vmem:[#allocation5 + $0x2a0] sm:$0xff]
    %v156 = vld [vmem:[#allocation5 + $0x2a8] sm:$0xff]
    %v157 = vld [vmem:[#allocation5 + $0x2b0] sm:$0xff]
    %v158 = vld [vmem:[#allocation5 + $0x2b8] sm:$0xff]
    %v159 = vld [vmem:[#allocation5 + $0x2c0] sm:$0xff]
    %v160 = vld [vmem:[#allocation5 + $0x2c8] sm:$0xff]
    %v161 = vld [vmem:[#allocation5 + $0x2d0] sm:$0xff]
    %v162 = vld [vmem:[#allocation5 + $0x2d8] sm:$0xff]
    %v163 = vld [vmem:[#allocation5 + $0x2e0] sm:$0xff]
    %v164 = vld [vmem:[#allocation5 + $0x2e8] sm:$0xff]
    %v165 = vld [vmem:[#allocation5 + $0x2f0] sm:$0xff]
    %v166 = vld [vmem:[#allocation5 + $0x2f8] sm:$0xff]
    %v167 = vld [vmem:[#allocation5 + $0x300] sm:$0xff]
    %v168 = vld [vmem:[#allocation5 + $0x308] sm:$0xff]
    %v169 = vld [vmem:[#allocation5 + $0x310] sm:$0xff]
    %v170 = vld [vmem:[#allocation5 + $0x318] sm:$0xff]
    %v171 = vld [vmem:[#allocation5 + $0x320] sm:$0xff]
    %v172 = vld [vmem:[#allocation5 + $0x328] sm:$0xff]
    %v173 = vld [vmem:[#allocation5 + $0x330] sm:$0xff]
    %v174 = vld [vmem:[#allocation5 + $0x338] sm:$0xff]
    %v175 = vld [vmem:[#allocation5 + $0x340] sm:$0xff]
    %v176 = vld [vmem:[#allocation5 + $0x348] sm:$0xff]
    %v177 = vld [vmem:[#allocation5 + $0x350] sm:$0xff]
    %v178 = vld [vmem:[#allocation5 + $0x358] sm:$0xff]
    %v179 = vld [vmem:[#allocation5 + $0x360] sm:$0xff]
    %v180 = vld [vmem:[#allocation5 + $0x368] sm:$0xff]
    %v181 = vld [vmem:[#allocation5 + $0x370] sm:$0xff]
    %v182 = vld [vmem:[#allocation5 + $0x378] sm:$0xff]
    %v183 = vld [vmem:[#allocation5 + $0x380] sm:$0xff]
    %v184 = vld [vmem:[#allocation5 + $0x388] sm:$0xff]
    %v185 = vld [vmem:[#allocation5 + $0x390] sm:$0xff]
    %v186 = vld [vmem:[#allocation5 + $0x398] sm:$0xff]
    %v187 = vld [vmem:[#allocation5 + $0x3a0] sm:$0xff]
    %v188 = vld [vmem:[#allocation5 + $0x3a8] sm:$0xff]
    %v189 = vld [vmem:[#allocation5 + $0x3b0] sm:$0xff]
    %v190 = vld [vmem:[#allocation5 + $0x3b8] sm:$0xff]
    %v191 = vld [vmem:[#allocation5 + $0x3c0] sm:$0xff]
    %v192 = vld [vmem:[#allocation5 + $0x3c8] sm:$0xff]
    %v193 = vld [vmem:[#allocation5 + $0x3d0] sm:$0xff]
    %v194 = vld [vmem:[#allocation5 + $0x3d8] sm:$0xff]
    %v195 = vld [vmem:[#allocation5 + $0x3e0] sm:$0xff]
    %v196 = vld [vmem:[#allocation5 + $0x3e8] sm:$0xff]
    %v197 = vld [vmem:[#allocation5 + $0x3f0] sm:$0xff]
    %v198 = vld [vmem:[#allocation5 + $0x3f8] sm:$0xff]
    %v199 = vld [vmem:[#allocation5 + $0x400] sm:$0xff]
    %v200 = vld [vmem:[#allocation5 + $0x408] sm:$0xff]
    %v201 = vld [vmem:[#allocation5 + $0x410] sm:$0xff]
    %v202 = vld [vmem:[#allocation5 + $0x418] sm:$0xff]
    %v203 = vld [vmem:[#allocation5 + $0x420] sm:$0xff]
    %v204 = vld [vmem:[#allocation5 + $0x428] sm:$0xff]
    %v205 = vld [vmem:[#allocation5 + $0x430] sm:$0xff]
    %v206 = vld [vmem:[#allocation5 + $0x438] sm:$0xff]
    %v207 = vld [vmem:[#allocation5 + $0x440] sm:$0xff]
    %v208 = vld [vmem:[#allocation5 + $0x448] sm:$0xff]
    %v209 = vld [vmem:[#allocation5 + $0x450] sm:$0xff]
    %v210 = vld [vmem:[#allocation5 + $0x458] sm:$0xff]
    %v211 = vld [vmem:[#allocation5 + $0x460] sm:$0xff]
    %v212 = vld [vmem:[#allocation5 + $0x468] sm:$0xff]
    %v213 = vld [vmem:[#allocation5 + $0x470] sm:$0xff]
    %v214 = vld [vmem:[#allocation5 + $0x478] sm:$0xff]
    %v215 = vld [vmem:[#allocation5 + $0x480] sm:$0xff]
    %v216 = vld [vmem:[#allocation5 + $0x488] sm:$0xff]
    %v217 = vld [vmem:[#allocation5 + $0x490] sm:$0xff]
    %v218 = vld [vmem:[#allocation5 + $0x498] sm:$0xff]
    %v219 = vld [vmem:[#allocation5 + $0x4a0] sm:$0xff]
    %v220 = vld [vmem:[#allocation5 + $0x4a8] sm:$0xff]
    %v221 = vld [vmem:[#allocation5 + $0x4b0] sm:$0xff]
    %v222 = vld [vmem:[#allocation5 + $0x4b8] sm:$0xff]
    %v223 = vld [vmem:[#allocation5 + $0x4c0] sm:$0xff]
    %v224 = vld [vmem:[#allocation5 + $0x4c8] sm:$0xff]
    %v225 = vld [vmem:[#allocation5 + $0x4d0] sm:$0xff]
    %v226 = vld [vmem:[#allocation5 + $0x4d8] sm:$0xff]
    %v227 = vld [vmem:[#allocation5 + $0x4e0] sm:$0xff]
    %v228 = vld [vmem:[#allocation5 + $0x4e8] sm:$0xff]
    %v229 = vld [vmem:[#allocation5 + $0x4f0] sm:$0xff]
    %v230 = vld [vmem:[#allocation5 + $0x4f8] sm:$0xff]
    %v231 = vld [vmem:[#allocation5 + $0x500] sm:$0xff]
    %v232 = vld [vmem:[#allocation5 + $0x508] sm:$0xff]
    %v233 = vld [vmem:[#allocation5 + $0x510] sm:$0xff]
    %v234 = vld [vmem:[#allocation5 + $0x518] sm:$0xff]
    %v235 = vld [vmem:[#allocation5 + $0x520] sm:$0xff]
    %v236 = vld [vmem:[#allocation5 + $0x528] sm:$0xff]
    %v237 = vld [vmem:[#allocation5 + $0x530] sm:$0xff]
    %v238 = vld [vmem:[#allocation5 + $0x538] sm:$0xff]
    %v239 = vld [vmem:[#allocation5 + $0x540] sm:$0xff]
    %v240 = vld [vmem:[#allocation5 + $0x548] sm:$0xff]
    %v241 = vld [vmem:[#allocation5 + $0x550] sm:$0xff]
    %v242 = vld [vmem:[#allocation5 + $0x558] sm:$0xff]
    %v243 = vld [vmem:[#allocation5 + $0x560] sm:$0xff]
    %v244 = vld [vmem:[#allocation5 + $0x568] sm:$0xff]
    %v245 = vld [vmem:[#allocation5 + $0x570] sm:$0xff]
    %v246 = vld [vmem:[#allocation5 + $0x578] sm:$0xff]
    %v247 = vld [vmem:[#allocation5 + $0x580] sm:$0xff]
    %v248 = vld [vmem:[#allocation5 + $0x588] sm:$0xff]
    %v249 = vld [vmem:[#allocation5 + $0x590] sm:$0xff]
    %v250 = vld [vmem:[#allocation5 + $0x598] sm:$0xff]
    %v251 = vld [vmem:[#allocation5 + $0x5a0] sm:$0xff]
    %v252 = vld [vmem:[#allocation5 + $0x5a8] sm:$0xff]
    %v253 = vld [vmem:[#allocation5 + $0x5b0] sm:$0xff]
    %v254 = vld [vmem:[#allocation5 + $0x5b8] sm:$0xff]
    %v255 = vld [vmem:[#allocation5 + $0x5c0] sm:$0xff]
    %v256 = vld [vmem:[#allocation5 + $0x5c8] sm:$0xff]
    %v257 = vld [vmem:[#allocation5 + $0x5d0] sm:$0xff]
    %v258 = vld [vmem:[#allocation5 + $0x5d8] sm:$0xff]
    %v259 = vld [vmem:[#allocation5 + $0x5e0] sm:$0xff]
    %v260 = vld [vmem:[#allocation5 + $0x5e8] sm:$0xff]
    %v261 = vld [vmem:[#allocation5 + $0x5f0] sm:$0xff]
    %v262 = vld [vmem:[#allocation5 + $0x5f8] sm:$0xff]
    %v263 = vld [vmem:[#allocation5 + $0x600] sm:$0xff]
    %v264 = vld [vmem:[#allocation5 + $0x608] sm:$0xff]
    %v265 = vld [vmem:[#allocation5 + $0x610] sm:$0xff]
    %v266 = vld [vmem:[#allocation5 + $0x618] sm:$0xff]
    %v267 = vld [vmem:[#allocation5 + $0x620] sm:$0xff]
    %v268 = vld [vmem:[#allocation5 + $0x628] sm:$0xff]
    %v269 = vld [vmem:[#allocation5 + $0x630] sm:$0xff]
    %v270 = vld [vmem:[#allocation5 + $0x638] sm:$0xff]
    %v271 = vld [vmem:[#allocation5 + $0x640] sm:$0xff]
    %v272 = vld [vmem:[#allocation5 + $0x648] sm:$0xff]
    %v273 = vld [vmem:[#allocation5 + $0x650] sm:$0xff]
    %v274 = vld [vmem:[#allocation5 + $0x658] sm:$0xff]
    %v275 = vld [vmem:[#allocation5 + $0x660] sm:$0xff]
    %v276 = vld [vmem:[#allocation5 + $0x668] sm:$0xff]
    %v277 = vld [vmem:[#allocation5 + $0x670] sm:$0xff]
    %v278 = vld [vmem:[#allocation5 + $0x678] sm:$0xff]
    %v279 = vld [vmem:[#allocation5 + $0x680] sm:$0xff]
    %v280 = vld [vmem:[#allocation5 + $0x688] sm:$0xff]
    %v281 = vld [vmem:[#allocation5 + $0x690] sm:$0xff]
    %v282 = vld [vmem:[#allocation5 + $0x698] sm:$0xff]
    %v283 = vld [vmem:[#allocation5 + $0x6a0] sm:$0xff]
    %v284 = vld [vmem:[#allocation5 + $0x6a8] sm:$0xff]
    %v285 = vld [vmem:[#allocation5 + $0x6b0] sm:$0xff]
    %v286 = vld [vmem:[#allocation5 + $0x6b8] sm:$0xff]
    %v287 = vld [vmem:[#allocation5 + $0x6c0] sm:$0xff]
    %v288 = vld [vmem:[#allocation5 + $0x6c8] sm:$0xff]
    %v289 = vld [vmem:[#allocation5 + $0x6d0] sm:$0xff]
    %v290 = vld [vmem:[#allocation5 + $0x6d8] sm:$0xff]
    %v291 = vld [vmem:[#allocation5 + $0x6e0] sm:$0xff]
    %v292 = vld [vmem:[#allocation5 + $0x6e8] sm:$0xff]
    %v293 = vld [vmem:[#allocation5 + $0x6f0] sm:$0xff]
    %v294 = vld [vmem:[#allocation5 + $0x6f8] sm:$0xff]
    %v295 = vld [vmem:[#allocation5 + $0x700] sm:$0xff]
    %v296 = vld [vmem:[#allocation5 + $0x708] sm:$0xff]
    %v297 = vld [vmem:[#allocation5 + $0x710] sm:$0xff]
    %v298 = vld [vmem:[#allocation5 + $0x718] sm:$0xff]
    %v299 = vld [vmem:[#allocation5 + $0x720] sm:$0xff]
    %v300 = vld [vmem:[#allocation5 + $0x728] sm:$0xff]
    %v301 = vld [vmem:[#allocation5 + $0x730] sm:$0xff]
    %v302 = vld [vmem:[#allocation5 + $0x738] sm:$0xff]
    %v303 = vld [vmem:[#allocation5 + $0x740] sm:$0xff]
    %v304 = vld [vmem:[#allocation5 + $0x748] sm:$0xff]
    %v305 = vld [vmem:[#allocation5 + $0x750] sm:$0xff]
    %v306 = vld [vmem:[#allocation5 + $0x758] sm:$0xff]
    %v307 = vld [vmem:[#allocation5 + $0x760] sm:$0xff]
    %v308 = vld [vmem:[#allocation5 + $0x768] sm:$0xff]
    %v309 = vld [vmem:[#allocation5 + $0x770] sm:$0xff]
    %v310 = vld [vmem:[#allocation5 + $0x778] sm:$0xff]
    %v311 = vld [vmem:[#allocation5 + $0x780] sm:$0xff]
    %v312 = vld [vmem:[#allocation5 + $0x788] sm:$0xff]
    %v313 = vld [vmem:[#allocation5 + $0x790] sm:$0xff]
    %v314 = vld [vmem:[#allocation5 + $0x798] sm:$0xff]
    %v315 = vld [vmem:[#allocation5 + $0x7a0] sm:$0xff]
    %v316 = vld [vmem:[#allocation5 + $0x7a8] sm:$0xff]
    %v317 = vld [vmem:[#allocation5 + $0x7b0] sm:$0xff]
    %v318 = vld [vmem:[#allocation5 + $0x7b8] sm:$0xff]
    %v319 = vld [vmem:[#allocation5 + $0x7c0] sm:$0xff]
    %v320 = vld [vmem:[#allocation5 + $0x7c8] sm:$0xff]
    %v321 = vld [vmem:[#allocation5 + $0x7d0] sm:$0xff]
    %v322 = vld [vmem:[#allocation5 + $0x7d8] sm:$0xff]
    %v323 = vld [vmem:[#allocation5 + $0x7e0] sm:$0xff]
    %v324 = vld [vmem:[#allocation5 + $0x7e8] sm:$0xff]
    %v325 = vld [vmem:[#allocation5 + $0x7f0] sm:$0xff]
    %v326 = vld [vmem:[#allocation5 + $0x7f8] sm:$0xff]
    %v327 = vld [vmem:[%s2] sm:$0xf]
    %v329 = vlaneseq
    %v330 = vshrl.u32 %v329, 7
    %v331 = vsub.s32 0, %v330
    %v332 = vrot.slane %v327, %v331
    %v333 = vlaneseq
    %v334 = vshrl.u32 %v333, 7
    %v335 = vsub.s32 1, %v334
    %v336 = vrot.slane %v327, %v335
    %v337 = vlaneseq
    %v338 = vshrl.u32 %v337, 7
    %v339 = vsub.s32 2, %v338
    %v340 = vrot.slane %v327, %v339
    %v341 = vlaneseq
    %v342 = vshrl.u32 %v341, 7
    %v343 = vsub.s32 3, %v342
    %v344 = vrot.slane %v327, %v343
    %v357 = vunpack.c.l.b16 %v63
    %v358 = vunpack.c.h.b16 %v63
    %v359 = vunpack.c.l.b16 %v64
    %v360 = vunpack.c.h.b16 %v64
    %v361 = vunpack.c.l.b16 %v65
    %v362 = vunpack.c.h.b16 %v65
    %v363 = vunpack.c.l.b16 %v66
    %v364 = vunpack.c.h.b16 %v66
    %v365 = vunpack.c.l.b16 %v67
    %v366 = vunpack.c.h.b16 %v67
    %v367 = vunpack.c.l.b16 %v68
    %v368 = vunpack.c.h.b16 %v68
    %v369 = vunpack.c.l.b16 %v69
    %v370 = vunpack.c.h.b16 %v69
    %v371 = vunpack.c.l.b16 %v70
    %v372 = vunpack.c.h.b16 %v70
    %v373 = vpack.c.b16 %v365, %v357
    %v374 = vpack.c.b16 %v366, %v358
    %v375 = vpack.c.b16 %v367, %v359
    %v376 = vpack.c.b16 %v368, %v360
    %v377 = vpack.c.b16 %v369, %v361
    %v378 = vpack.c.b16 %v370, %v362
    %v379 = vpack.c.b16 %v371, %v363
    %v380 = vpack.c.b16 %v372, %v364
    %v645 = vunpack.c.l.b16 %v71
    %v646 = vunpack.c.h.b16 %v71
    %v647 = vunpack.c.l.b16 %v72
    %v648 = vunpack.c.h.b16 %v72
    %v649 = vunpack.c.l.b16 %v73
    %v650 = vunpack.c.h.b16 %v73
    %v651 = vunpack.c.l.b16 %v74
    %v652 = vunpack.c.h.b16 %v74
    %v653 = vunpack.c.l.b16 %v75
    %v654 = vunpack.c.h.b16 %v75
    %v655 = vunpack.c.l.b16 %v76
    %v656 = vunpack.c.h.b16 %v76
    %v657 = vunpack.c.l.b16 %v77
    %v658 = vunpack.c.h.b16 %v77
    %v659 = vunpack.c.l.b16 %v78
    %v660 = vunpack.c.h.b16 %v78
    %v661 = vunpack.c.l.b16 %v79
    %v662 = vunpack.c.h.b16 %v79
    %v663 = vunpack.c.l.b16 %v80
    %v664 = vunpack.c.h.b16 %v80
    %v665 = vunpack.c.l.b16 %v81
    %v666 = vunpack.c.h.b16 %v81
    %v667 = vunpack.c.l.b16 %v82
    %v668 = vunpack.c.h.b16 %v82
    %v669 = vunpack.c.l.b16 %v83
    %v670 = vunpack.c.h.b16 %v83
    %v671 = vunpack.c.l.b16 %v84
    %v672 = vunpack.c.h.b16 %v84
    %v673 = vunpack.c.l.b16 %v85
    %v674 = vunpack.c.h.b16 %v85
    %v675 = vunpack.c.l.b16 %v86
    %v676 = vunpack.c.h.b16 %v86
    %v677 = vunpack.c.l.b16 %v87
    %v678 = vunpack.c.h.b16 %v87
    %v679 = vunpack.c.l.b16 %v88
    %v680 = vunpack.c.h.b16 %v88
    %v681 = vunpack.c.l.b16 %v89
    %v682 = vunpack.c.h.b16 %v89
    %v683 = vunpack.c.l.b16 %v90
    %v684 = vunpack.c.h.b16 %v90
    %v685 = vunpack.c.l.b16 %v91
    %v686 = vunpack.c.h.b16 %v91
    %v687 = vunpack.c.l.b16 %v92
    %v688 = vunpack.c.h.b16 %v92
    %v689 = vunpack.c.l.b16 %v93
    %v690 = vunpack.c.h.b16 %v93
    %v691 = vunpack.c.l.b16 %v94
    %v692 = vunpack.c.h.b16 %v94
    %v693 = vunpack.c.l.b16 %v95
    %v694 = vunpack.c.h.b16 %v95
    %v695 = vunpack.c.l.b16 %v96
    %v696 = vunpack.c.h.b16 %v96
    %v697 = vunpack.c.l.b16 %v97
    %v698 = vunpack.c.h.b16 %v97
    %v699 = vunpack.c.l.b16 %v98
    %v700 = vunpack.c.h.b16 %v98
    %v701 = vunpack.c.l.b16 %v99
    %v702 = vunpack.c.h.b16 %v99
    %v703 = vunpack.c.l.b16 %v100
    %v704 = vunpack.c.h.b16 %v100
    %v705 = vunpack.c.l.b16 %v101
    %v706 = vunpack.c.h.b16 %v101
    %v707 = vunpack.c.l.b16 %v102
    %v708 = vunpack.c.h.b16 %v102
    %v709 = vunpack.c.l.b16 %v103
    %v710 = vunpack.c.h.b16 %v103
    %v711 = vunpack.c.l.b16 %v104
    %v712 = vunpack.c.h.b16 %v104
    %v713 = vunpack.c.l.b16 %v105
    %v714 = vunpack.c.h.b16 %v105
    %v715 = vunpack.c.l.b16 %v106
    %v716 = vunpack.c.h.b16 %v106
    %v717 = vunpack.c.l.b16 %v107
    %v718 = vunpack.c.h.b16 %v107
    %v719 = vunpack.c.l.b16 %v108
    %v720 = vunpack.c.h.b16 %v108
    %v721 = vunpack.c.l.b16 %v109
    %v722 = vunpack.c.h.b16 %v109
    %v723 = vunpack.c.l.b16 %v110
    %v724 = vunpack.c.h.b16 %v110
    %v725 = vunpack.c.l.b16 %v111
    %v726 = vunpack.c.h.b16 %v111
    %v727 = vunpack.c.l.b16 %v112
    %v728 = vunpack.c.h.b16 %v112
    %v729 = vunpack.c.l.b16 %v113
    %v730 = vunpack.c.h.b16 %v113
    %v731 = vunpack.c.l.b16 %v114
    %v732 = vunpack.c.h.b16 %v114
    %v733 = vunpack.c.l.b16 %v115
    %v734 = vunpack.c.h.b16 %v115
    %v735 = vunpack.c.l.b16 %v116
    %v736 = vunpack.c.h.b16 %v116
    %v737 = vunpack.c.l.b16 %v117
    %v738 = vunpack.c.h.b16 %v117
    %v739 = vunpack.c.l.b16 %v118
    %v740 = vunpack.c.h.b16 %v118
    %v741 = vunpack.c.l.b16 %v119
    %v742 = vunpack.c.h.b16 %v119
    %v743 = vunpack.c.l.b16 %v120
    %v744 = vunpack.c.h.b16 %v120
    %v745 = vunpack.c.l.b16 %v121
    %v746 = vunpack.c.h.b16 %v121
    %v747 = vunpack.c.l.b16 %v122
    %v748 = vunpack.c.h.b16 %v122
    %v749 = vunpack.c.l.b16 %v123
    %v750 = vunpack.c.h.b16 %v123
    %v751 = vunpack.c.l.b16 %v124
    %v752 = vunpack.c.h.b16 %v124
    %v753 = vunpack.c.l.b16 %v125
    %v754 = vunpack.c.h.b16 %v125
    %v755 = vunpack.c.l.b16 %v126
    %v756 = vunpack.c.h.b16 %v126
    %v757 = vunpack.c.l.b16 %v127
    %v758 = vunpack.c.h.b16 %v127
    %v759 = vunpack.c.l.b16 %v128
    %v760 = vunpack.c.h.b16 %v128
    %v761 = vunpack.c.l.b16 %v129
    %v762 = vunpack.c.h.b16 %v129
    %v763 = vunpack.c.l.b16 %v130
    %v764 = vunpack.c.h.b16 %v130
    %v765 = vunpack.c.l.b16 %v131
    %v766 = vunpack.c.h.b16 %v131
    %v767 = vunpack.c.l.b16 %v132
    %v768 = vunpack.c.h.b16 %v132
    %v769 = vunpack.c.l.b16 %v133
    %v770 = vunpack.c.h.b16 %v133
    %v771 = vunpack.c.l.b16 %v134
    %v772 = vunpack.c.h.b16 %v134
    %v773 = vunpack.c.l.b16 %v135
    %v774 = vunpack.c.h.b16 %v135
    %v775 = vunpack.c.l.b16 %v136
    %v776 = vunpack.c.h.b16 %v136
    %v777 = vunpack.c.l.b16 %v137
    %v778 = vunpack.c.h.b16 %v137
    %v779 = vunpack.c.l.b16 %v138
    %v780 = vunpack.c.h.b16 %v138
    %v781 = vunpack.c.l.b16 %v139
    %v782 = vunpack.c.h.b16 %v139
    %v783 = vunpack.c.l.b16 %v140
    %v784 = vunpack.c.h.b16 %v140
    %v785 = vunpack.c.l.b16 %v141
    %v786 = vunpack.c.h.b16 %v141
    %v787 = vunpack.c.l.b16 %v142
    %v788 = vunpack.c.h.b16 %v142
    %v789 = vunpack.c.l.b16 %v143
    %v790 = vunpack.c.h.b16 %v143
    %v791 = vunpack.c.l.b16 %v144
    %v792 = vunpack.c.h.b16 %v144
    %v793 = vunpack.c.l.b16 %v145
    %v794 = vunpack.c.h.b16 %v145
    %v795 = vunpack.c.l.b16 %v146
    %v796 = vunpack.c.h.b16 %v146
    %v797 = vunpack.c.l.b16 %v147
    %v798 = vunpack.c.h.b16 %v147
    %v799 = vunpack.c.l.b16 %v148
    %v800 = vunpack.c.h.b16 %v148
    %v801 = vunpack.c.l.b16 %v149
    %v802 = vunpack.c.h.b16 %v149
    %v803 = vunpack.c.l.b16 %v150
    %v804 = vunpack.c.h.b16 %v150
    %v805 = vunpack.c.l.b16 %v151
    %v806 = vunpack.c.h.b16 %v151
    %v807 = vunpack.c.l.b16 %v152
    %v808 = vunpack.c.h.b16 %v152
    %v809 = vunpack.c.l.b16 %v153
    %v810 = vunpack.c.h.b16 %v153
    %v811 = vunpack.c.l.b16 %v154
    %v812 = vunpack.c.h.b16 %v154
    %v813 = vunpack.c.l.b16 %v155
    %v814 = vunpack.c.h.b16 %v155
    %v815 = vunpack.c.l.b16 %v156
    %v816 = vunpack.c.h.b16 %v156
    %v817 = vunpack.c.l.b16 %v157
    %v818 = vunpack.c.h.b16 %v157
    %v819 = vunpack.c.l.b16 %v158
    %v820 = vunpack.c.h.b16 %v158
    %v821 = vunpack.c.l.b16 %v159
    %v822 = vunpack.c.h.b16 %v159
    %v823 = vunpack.c.l.b16 %v160
    %v824 = vunpack.c.h.b16 %v160
    %v825 = vunpack.c.l.b16 %v161
    %v826 = vunpack.c.h.b16 %v161
    %v827 = vunpack.c.l.b16 %v162
    %v828 = vunpack.c.h.b16 %v162
    %v829 = vunpack.c.l.b16 %v163
    %v830 = vunpack.c.h.b16 %v163
    %v831 = vunpack.c.l.b16 %v164
    %v832 = vunpack.c.h.b16 %v164
    %v833 = vunpack.c.l.b16 %v165
    %v834 = vunpack.c.h.b16 %v165
    %v835 = vunpack.c.l.b16 %v166
    %v836 = vunpack.c.h.b16 %v166
    %v837 = vunpack.c.l.b16 %v167
    %v838 = vunpack.c.h.b16 %v167
    %v839 = vunpack.c.l.b16 %v168
    %v840 = vunpack.c.h.b16 %v168
    %v841 = vunpack.c.l.b16 %v169
    %v842 = vunpack.c.h.b16 %v169
    %v843 = vunpack.c.l.b16 %v170
    %v844 = vunpack.c.h.b16 %v170
    %v845 = vunpack.c.l.b16 %v171
    %v846 = vunpack.c.h.b16 %v171
    %v847 = vunpack.c.l.b16 %v172
    %v848 = vunpack.c.h.b16 %v172
    %v849 = vunpack.c.l.b16 %v173
    %v850 = vunpack.c.h.b16 %v173
    %v851 = vunpack.c.l.b16 %v174
    %v852 = vunpack.c.h.b16 %v174
    %v853 = vunpack.c.l.b16 %v175
    %v854 = vunpack.c.h.b16 %v175
    %v855 = vunpack.c.l.b16 %v176
    %v856 = vunpack.c.h.b16 %v176
    %v857 = vunpack.c.l.b16 %v177
    %v858 = vunpack.c.h.b16 %v177
    %v859 = vunpack.c.l.b16 %v178
    %v860 = vunpack.c.h.b16 %v178
    %v861 = vunpack.c.l.b16 %v179
    %v862 = vunpack.c.h.b16 %v179
    %v863 = vunpack.c.l.b16 %v180
    %v864 = vunpack.c.h.b16 %v180
    %v865 = vunpack.c.l.b16 %v181
    %v866 = vunpack.c.h.b16 %v181
    %v867 = vunpack.c.l.b16 %v182
    %v868 = vunpack.c.h.b16 %v182
    %v869 = vunpack.c.l.b16 %v183
    %v870 = vunpack.c.h.b16 %v183
    %v871 = vunpack.c.l.b16 %v184
    %v872 = vunpack.c.h.b16 %v184
    %v873 = vunpack.c.l.b16 %v185
    %v874 = vunpack.c.h.b16 %v185
    %v875 = vunpack.c.l.b16 %v186
    %v876 = vunpack.c.h.b16 %v186
    %v877 = vunpack.c.l.b16 %v187
    %v878 = vunpack.c.h.b16 %v187
    %v879 = vunpack.c.l.b16 %v188
    %v880 = vunpack.c.h.b16 %v188
    %v881 = vunpack.c.l.b16 %v189
    %v882 = vunpack.c.h.b16 %v189
    %v883 = vunpack.c.l.b16 %v190
    %v884 = vunpack.c.h.b16 %v190
    %v885 = vunpack.c.l.b16 %v191
    %v886 = vunpack.c.h.b16 %v191
    %v887 = vunpack.c.l.b16 %v192
    %v888 = vunpack.c.h.b16 %v192
    %v889 = vunpack.c.l.b16 %v193
    %v890 = vunpack.c.h.b16 %v193
    %v891 = vunpack.c.l.b16 %v194
    %v892 = vunpack.c.h.b16 %v194
    %v893 = vunpack.c.l.b16 %v195
    %v894 = vunpack.c.h.b16 %v195
    %v895 = vunpack.c.l.b16 %v196
    %v896 = vunpack.c.h.b16 %v196
    %v897 = vunpack.c.l.b16 %v197
    %v898 = vunpack.c.h.b16 %v197
    %v899 = vunpack.c.l.b16 %v198
    %v900 = vunpack.c.h.b16 %v198
    %v901 = vunpack.c.l.b16 %v199
    %v902 = vunpack.c.h.b16 %v199
    %v903 = vunpack.c.l.b16 %v200
    %v904 = vunpack.c.h.b16 %v200
    %v905 = vunpack.c.l.b16 %v201
    %v906 = vunpack.c.h.b16 %v201
    %v907 = vunpack.c.l.b16 %v202
    %v908 = vunpack.c.h.b16 %v202
    %v909 = vunpack.c.l.b16 %v203
    %v910 = vunpack.c.h.b16 %v203
    %v911 = vunpack.c.l.b16 %v204
    %v912 = vunpack.c.h.b16 %v204
    %v913 = vunpack.c.l.b16 %v205
    %v914 = vunpack.c.h.b16 %v205
    %v915 = vunpack.c.l.b16 %v206
    %v916 = vunpack.c.h.b16 %v206
    %v917 = vunpack.c.l.b16 %v207
    %v918 = vunpack.c.h.b16 %v207
    %v919 = vunpack.c.l.b16 %v208
    %v920 = vunpack.c.h.b16 %v208
    %v921 = vunpack.c.l.b16 %v209
    %v922 = vunpack.c.h.b16 %v209
    %v923 = vunpack.c.l.b16 %v210
    %v924 = vunpack.c.h.b16 %v210
    %v925 = vunpack.c.l.b16 %v211
    %v926 = vunpack.c.h.b16 %v211
    %v927 = vunpack.c.l.b16 %v212
    %v928 = vunpack.c.h.b16 %v212
    %v929 = vunpack.c.l.b16 %v213
    %v930 = vunpack.c.h.b16 %v213
    %v931 = vunpack.c.l.b16 %v214
    %v932 = vunpack.c.h.b16 %v214
    %v933 = vunpack.c.l.b16 %v215
    %v934 = vunpack.c.h.b16 %v215
    %v935 = vunpack.c.l.b16 %v216
    %v936 = vunpack.c.h.b16 %v216
    %v937 = vunpack.c.l.b16 %v217
    %v938 = vunpack.c.h.b16 %v217
    %v939 = vunpack.c.l.b16 %v218
    %v940 = vunpack.c.h.b16 %v218
    %v941 = vunpack.c.l.b16 %v219
    %v942 = vunpack.c.h.b16 %v219
    %v943 = vunpack.c.l.b16 %v220
    %v944 = vunpack.c.h.b16 %v220
    %v945 = vunpack.c.l.b16 %v221
    %v946 = vunpack.c.h.b16 %v221
    %v947 = vunpack.c.l.b16 %v222
    %v948 = vunpack.c.h.b16 %v222
    %v949 = vunpack.c.l.b16 %v223
    %v950 = vunpack.c.h.b16 %v223
    %v951 = vunpack.c.l.b16 %v224
    %v952 = vunpack.c.h.b16 %v224
    %v953 = vunpack.c.l.b16 %v225
    %v954 = vunpack.c.h.b16 %v225
    %v955 = vunpack.c.l.b16 %v226
    %v956 = vunpack.c.h.b16 %v226
    %v957 = vunpack.c.l.b16 %v227
    %v958 = vunpack.c.h.b16 %v227
    %v959 = vunpack.c.l.b16 %v228
    %v960 = vunpack.c.h.b16 %v228
    %v961 = vunpack.c.l.b16 %v229
    %v962 = vunpack.c.h.b16 %v229
    %v963 = vunpack.c.l.b16 %v230
    %v964 = vunpack.c.h.b16 %v230
    %v965 = vunpack.c.l.b16 %v231
    %v966 = vunpack.c.h.b16 %v231
    %v967 = vunpack.c.l.b16 %v232
    %v968 = vunpack.c.h.b16 %v232
    %v969 = vunpack.c.l.b16 %v233
    %v970 = vunpack.c.h.b16 %v233
    %v971 = vunpack.c.l.b16 %v234
    %v972 = vunpack.c.h.b16 %v234
    %v973 = vunpack.c.l.b16 %v235
    %v974 = vunpack.c.h.b16 %v235
    %v975 = vunpack.c.l.b16 %v236
    %v976 = vunpack.c.h.b16 %v236
    %v977 = vunpack.c.l.b16 %v237
    %v978 = vunpack.c.h.b16 %v237
    %v979 = vunpack.c.l.b16 %v238
    %v980 = vunpack.c.h.b16 %v238
    %v981 = vunpack.c.l.b16 %v239
    %v982 = vunpack.c.h.b16 %v239
    %v983 = vunpack.c.l.b16 %v240
    %v984 = vunpack.c.h.b16 %v240
    %v985 = vunpack.c.l.b16 %v241
    %v986 = vunpack.c.h.b16 %v241
    %v987 = vunpack.c.l.b16 %v242
    %v988 = vunpack.c.h.b16 %v242
    %v989 = vunpack.c.l.b16 %v243
    %v990 = vunpack.c.h.b16 %v243
    %v991 = vunpack.c.l.b16 %v244
    %v992 = vunpack.c.h.b16 %v244
    %v993 = vunpack.c.l.b16 %v245
    %v994 = vunpack.c.h.b16 %v245
    %v995 = vunpack.c.l.b16 %v246
    %v996 = vunpack.c.h.b16 %v246
    %v997 = vunpack.c.l.b16 %v247
    %v998 = vunpack.c.h.b16 %v247
    %v999 = vunpack.c.l.b16 %v248
    %v1000 = vunpack.c.h.b16 %v248
    %v1001 = vunpack.c.l.b16 %v249
    %v1002 = vunpack.c.h.b16 %v249
    %v1003 = vunpack.c.l.b16 %v250
    %v1004 = vunpack.c.h.b16 %v250
    %v1005 = vunpack.c.l.b16 %v251
    %v1006 = vunpack.c.h.b16 %v251
    %v1007 = vunpack.c.l.b16 %v252
    %v1008 = vunpack.c.h.b16 %v252
    %v1009 = vunpack.c.l.b16 %v253
    %v1010 = vunpack.c.h.b16 %v253
    %v1011 = vunpack.c.l.b16 %v254
    %v1012 = vunpack.c.h.b16 %v254
    %v1013 = vunpack.c.l.b16 %v255
    %v1014 = vunpack.c.h.b16 %v255
    %v1015 = vunpack.c.l.b16 %v256
    %v1016 = vunpack.c.h.b16 %v256
    %v1017 = vunpack.c.l.b16 %v257
    %v1018 = vunpack.c.h.b16 %v257
    %v1019 = vunpack.c.l.b16 %v258
    %v1020 = vunpack.c.h.b16 %v258
    %v1021 = vunpack.c.l.b16 %v259
    %v1022 = vunpack.c.h.b16 %v259
    %v1023 = vunpack.c.l.b16 %v260
    %v1024 = vunpack.c.h.b16 %v260
    %v1025 = vunpack.c.l.b16 %v261
    %v1026 = vunpack.c.h.b16 %v261
    %v1027 = vunpack.c.l.b16 %v262
    %v1028 = vunpack.c.h.b16 %v262
    %v1029 = vunpack.c.l.b16 %v263
    %v1030 = vunpack.c.h.b16 %v263
    %v1031 = vunpack.c.l.b16 %v264
    %v1032 = vunpack.c.h.b16 %v264
    %v1033 = vunpack.c.l.b16 %v265
    %v1034 = vunpack.c.h.b16 %v265
    %v1035 = vunpack.c.l.b16 %v266
    %v1036 = vunpack.c.h.b16 %v266
    %v1037 = vunpack.c.l.b16 %v267
    %v1038 = vunpack.c.h.b16 %v267
    %v1039 = vunpack.c.l.b16 %v268
    %v1040 = vunpack.c.h.b16 %v268
    %v1041 = vunpack.c.l.b16 %v269
    %v1042 = vunpack.c.h.b16 %v269
    %v1043 = vunpack.c.l.b16 %v270
    %v1044 = vunpack.c.h.b16 %v270
    %v1045 = vunpack.c.l.b16 %v271
    %v1046 = vunpack.c.h.b16 %v271
    %v1047 = vunpack.c.l.b16 %v272
    %v1048 = vunpack.c.h.b16 %v272
    %v1049 = vunpack.c.l.b16 %v273
    %v1050 = vunpack.c.h.b16 %v273
    %v1051 = vunpack.c.l.b16 %v274
    %v1052 = vunpack.c.h.b16 %v274
    %v1053 = vunpack.c.l.b16 %v275
    %v1054 = vunpack.c.h.b16 %v275
    %v1055 = vunpack.c.l.b16 %v276
    %v1056 = vunpack.c.h.b16 %v276
    %v1057 = vunpack.c.l.b16 %v277
    %v1058 = vunpack.c.h.b16 %v277
    %v1059 = vunpack.c.l.b16 %v278
    %v1060 = vunpack.c.h.b16 %v278
    %v1061 = vunpack.c.l.b16 %v279
    %v1062 = vunpack.c.h.b16 %v279
    %v1063 = vunpack.c.l.b16 %v280
    %v1064 = vunpack.c.h.b16 %v280
    %v1065 = vunpack.c.l.b16 %v281
    %v1066 = vunpack.c.h.b16 %v281
    %v1067 = vunpack.c.l.b16 %v282
    %v1068 = vunpack.c.h.b16 %v282
    %v1069 = vunpack.c.l.b16 %v283
    %v1070 = vunpack.c.h.b16 %v283
    %v1071 = vunpack.c.l.b16 %v284
    %v1072 = vunpack.c.h.b16 %v284
    %v1073 = vunpack.c.l.b16 %v285
    %v1074 = vunpack.c.h.b16 %v285
    %v1075 = vunpack.c.l.b16 %v286
    %v1076 = vunpack.c.h.b16 %v286
    %v1077 = vunpack.c.l.b16 %v287
    %v1078 = vunpack.c.h.b16 %v287
    %v1079 = vunpack.c.l.b16 %v288
    %v1080 = vunpack.c.h.b16 %v288
    %v1081 = vunpack.c.l.b16 %v289
    %v1082 = vunpack.c.h.b16 %v289
    %v1083 = vunpack.c.l.b16 %v290
    %v1084 = vunpack.c.h.b16 %v290
    %v1085 = vunpack.c.l.b16 %v291
    %v1086 = vunpack.c.h.b16 %v291
    %v1087 = vunpack.c.l.b16 %v292
    %v1088 = vunpack.c.h.b16 %v292
    %v1089 = vunpack.c.l.b16 %v293
    %v1090 = vunpack.c.h.b16 %v293
    %v1091 = vunpack.c.l.b16 %v294
    %v1092 = vunpack.c.h.b16 %v294
    %v1093 = vunpack.c.l.b16 %v295
    %v1094 = vunpack.c.h.b16 %v295
    %v1095 = vunpack.c.l.b16 %v296
    %v1096 = vunpack.c.h.b16 %v296
    %v1097 = vunpack.c.l.b16 %v297
    %v1098 = vunpack.c.h.b16 %v297
    %v1099 = vunpack.c.l.b16 %v298
    %v1100 = vunpack.c.h.b16 %v298
    %v1101 = vunpack.c.l.b16 %v299
    %v1102 = vunpack.c.h.b16 %v299
    %v1103 = vunpack.c.l.b16 %v300
    %v1104 = vunpack.c.h.b16 %v300
    %v1105 = vunpack.c.l.b16 %v301
    %v1106 = vunpack.c.h.b16 %v301
    %v1107 = vunpack.c.l.b16 %v302
    %v1108 = vunpack.c.h.b16 %v302
    %v1109 = vunpack.c.l.b16 %v303
    %v1110 = vunpack.c.h.b16 %v303
    %v1111 = vunpack.c.l.b16 %v304
    %v1112 = vunpack.c.h.b16 %v304
    %v1113 = vunpack.c.l.b16 %v305
    %v1114 = vunpack.c.h.b16 %v305
    %v1115 = vunpack.c.l.b16 %v306
    %v1116 = vunpack.c.h.b16 %v306
    %v1117 = vunpack.c.l.b16 %v307
    %v1118 = vunpack.c.h.b16 %v307
    %v1119 = vunpack.c.l.b16 %v308
    %v1120 = vunpack.c.h.b16 %v308
    %v1121 = vunpack.c.l.b16 %v309
    %v1122 = vunpack.c.h.b16 %v309
    %v1123 = vunpack.c.l.b16 %v310
    %v1124 = vunpack.c.h.b16 %v310
    %v1125 = vunpack.c.l.b16 %v311
    %v1126 = vunpack.c.h.b16 %v311
    %v1127 = vunpack.c.l.b16 %v312
    %v1128 = vunpack.c.h.b16 %v312
    %v1129 = vunpack.c.l.b16 %v313
    %v1130 = vunpack.c.h.b16 %v313
    %v1131 = vunpack.c.l.b16 %v314
    %v1132 = vunpack.c.h.b16 %v314
    %v1133 = vunpack.c.l.b16 %v315
    %v1134 = vunpack.c.h.b16 %v315
    %v1135 = vunpack.c.l.b16 %v316
    %v1136 = vunpack.c.h.b16 %v316
    %v1137 = vunpack.c.l.b16 %v317
    %v1138 = vunpack.c.h.b16 %v317
    %v1139 = vunpack.c.l.b16 %v318
    %v1140 = vunpack.c.h.b16 %v318
    %v1141 = vunpack.c.l.b16 %v319
    %v1142 = vunpack.c.h.b16 %v319
    %v1143 = vunpack.c.l.b16 %v320
    %v1144 = vunpack.c.h.b16 %v320
    %v1145 = vunpack.c.l.b16 %v321
    %v1146 = vunpack.c.h.b16 %v321
    %v1147 = vunpack.c.l.b16 %v322
    %v1148 = vunpack.c.h.b16 %v322
    %v1149 = vunpack.c.l.b16 %v323
    %v1150 = vunpack.c.h.b16 %v323
    %v1151 = vunpack.c.l.b16 %v324
    %v1152 = vunpack.c.h.b16 %v324
    %v1153 = vunpack.c.l.b16 %v325
    %v1154 = vunpack.c.h.b16 %v325
    %v1155 = vunpack.c.l.b16 %v326
    %v1156 = vunpack.c.h.b16 %v326
    %v1157 = vpack.c.b16 %v649, %v645
    %v1158 = vpack.c.b16 %v650, %v646
    %v1159 = vpack.c.b16 %v651, %v647
    %v1160 = vpack.c.b16 %v652, %v648
    %v1161 = vpack.c.b16 %v657, %v653
    %v1162 = vpack.c.b16 %v658, %v654
    %v1163 = vpack.c.b16 %v659, %v655
    %v1164 = vpack.c.b16 %v660, %v656
    %v1165 = vpack.c.b16 %v665, %v661
    %v1166 = vpack.c.b16 %v666, %v662
    %v1167 = vpack.c.b16 %v667, %v663
    %v1168 = vpack.c.b16 %v668, %v664
    %v1169 = vpack.c.b16 %v673, %v669
    %v1170 = vpack.c.b16 %v674, %v670
    %v1171 = vpack.c.b16 %v675, %v671
    %v1172 = vpack.c.b16 %v676, %v672
    %v1173 = vpack.c.b16 %v681, %v677
    %v1174 = vpack.c.b16 %v682, %v678
    %v1175 = vpack.c.b16 %v683, %v679
    %v1176 = vpack.c.b16 %v684, %v680
    %v1177 = vpack.c.b16 %v689, %v685
    %v1178 = vpack.c.b16 %v690, %v686
    %v1179 = vpack.c.b16 %v691, %v687
    %v1180 = vpack.c.b16 %v692, %v688
    %v1181 = vpack.c.b16 %v697, %v693
    %v1182 = vpack.c.b16 %v698, %v694
    %v1183 = vpack.c.b16 %v699, %v695
    %v1184 = vpack.c.b16 %v700, %v696
    %v1185 = vpack.c.b16 %v705, %v701
    %v1186 = vpack.c.b16 %v706, %v702
    %v1187 = vpack.c.b16 %v707, %v703
    %v1188 = vpack.c.b16 %v708, %v704
    %v1189 = vpack.c.b16 %v713, %v709
    %v1190 = vpack.c.b16 %v714, %v710
    %v1191 = vpack.c.b16 %v715, %v711
    %v1192 = vpack.c.b16 %v716, %v712
    %v1193 = vpack.c.b16 %v721, %v717
    %v1194 = vpack.c.b16 %v722, %v718
    %v1195 = vpack.c.b16 %v723, %v719
    %v1196 = vpack.c.b16 %v724, %v720
    %v1197 = vpack.c.b16 %v729, %v725
    %v1198 = vpack.c.b16 %v730, %v726
    %v1199 = vpack.c.b16 %v731, %v727
    %v1200 = vpack.c.b16 %v732, %v728
    %v1201 = vpack.c.b16 %v737, %v733
    %v1202 = vpack.c.b16 %v738, %v734
    %v1203 = vpack.c.b16 %v739, %v735
    %v1204 = vpack.c.b16 %v740, %v736
    %v1205 = vpack.c.b16 %v745, %v741
    %v1206 = vpack.c.b16 %v746, %v742
    %v1207 = vpack.c.b16 %v747, %v743
    %v1208 = vpack.c.b16 %v748, %v744
    %v1209 = vpack.c.b16 %v753, %v749
    %v1210 = vpack.c.b16 %v754, %v750
    %v1211 = vpack.c.b16 %v755, %v751
    %v1212 = vpack.c.b16 %v756, %v752
    %v1213 = vpack.c.b16 %v761, %v757
    %v1214 = vpack.c.b16 %v762, %v758
    %v1215 = vpack.c.b16 %v763, %v759
    %v1216 = vpack.c.b16 %v764, %v760
    %v1217 = vpack.c.b16 %v769, %v765
    %v1218 = vpack.c.b16 %v770, %v766
    %v1219 = vpack.c.b16 %v771, %v767
    %v1220 = vpack.c.b16 %v772, %v768
    %v1221 = vpack.c.b16 %v777, %v773
    %v1222 = vpack.c.b16 %v778, %v774
    %v1223 = vpack.c.b16 %v779, %v775
    %v1224 = vpack.c.b16 %v780, %v776
    %v1225 = vpack.c.b16 %v785, %v781
    %v1226 = vpack.c.b16 %v786, %v782
    %v1227 = vpack.c.b16 %v787, %v783
    %v1228 = vpack.c.b16 %v788, %v784
    %v1229 = vpack.c.b16 %v793, %v789
    %v1230 = vpack.c.b16 %v794, %v790
    %v1231 = vpack.c.b16 %v795, %v791
    %v1232 = vpack.c.b16 %v796, %v792
    %v1233 = vpack.c.b16 %v801, %v797
    %v1234 = vpack.c.b16 %v802, %v798
    %v1235 = vpack.c.b16 %v803, %v799
    %v1236 = vpack.c.b16 %v804, %v800
    %v1237 = vpack.c.b16 %v809, %v805
    %v1238 = vpack.c.b16 %v810, %v806
    %v1239 = vpack.c.b16 %v811, %v807
    %v1240 = vpack.c.b16 %v812, %v808
    %v1241 = vpack.c.b16 %v817, %v813
    %v1242 = vpack.c.b16 %v818, %v814
    %v1243 = vpack.c.b16 %v819, %v815
    %v1244 = vpack.c.b16 %v820, %v816
    %v1245 = vpack.c.b16 %v825, %v821
    %v1246 = vpack.c.b16 %v826, %v822
    %v1247 = vpack.c.b16 %v827, %v823
    %v1248 = vpack.c.b16 %v828, %v824
    %v1249 = vpack.c.b16 %v833, %v829
    %v1250 = vpack.c.b16 %v834, %v830
    %v1251 = vpack.c.b16 %v835, %v831
    %v1252 = vpack.c.b16 %v836, %v832
    %v1253 = vpack.c.b16 %v841, %v837
    %v1254 = vpack.c.b16 %v842, %v838
    %v1255 = vpack.c.b16 %v843, %v839
    %v1256 = vpack.c.b16 %v844, %v840
    %v1257 = vpack.c.b16 %v849, %v845
    %v1258 = vpack.c.b16 %v850, %v846
    %v1259 = vpack.c.b16 %v851, %v847
    %v1260 = vpack.c.b16 %v852, %v848
    %v1261 = vpack.c.b16 %v857, %v853
    %v1262 = vpack.c.b16 %v858, %v854
    %v1263 = vpack.c.b16 %v859, %v855
    %v1264 = vpack.c.b16 %v860, %v856
    %v1265 = vpack.c.b16 %v865, %v861
    %v1266 = vpack.c.b16 %v866, %v862
    %v1267 = vpack.c.b16 %v867, %v863
    %v1268 = vpack.c.b16 %v868, %v864
    %v1269 = vpack.c.b16 %v873, %v869
    %v1270 = vpack.c.b16 %v874, %v870
    %v1271 = vpack.c.b16 %v875, %v871
    %v1272 = vpack.c.b16 %v876, %v872
    %v1273 = vpack.c.b16 %v881, %v877
    %v1274 = vpack.c.b16 %v882, %v878
    %v1275 = vpack.c.b16 %v883, %v879
    %v1276 = vpack.c.b16 %v884, %v880
    %v1277 = vpack.c.b16 %v889, %v885
    %v1278 = vpack.c.b16 %v890, %v886
    %v1279 = vpack.c.b16 %v891, %v887
    %v1280 = vpack.c.b16 %v892, %v888
    %v1281 = vpack.c.b16 %v897, %v893
    %v1282 = vpack.c.b16 %v898, %v894
    %v1283 = vpack.c.b16 %v899, %v895
    %v1284 = vpack.c.b16 %v900, %v896
    %v1285 = vpack.c.b16 %v905, %v901
    %v1286 = vpack.c.b16 %v906, %v902
    %v1287 = vpack.c.b16 %v907, %v903
    %v1288 = vpack.c.b16 %v908, %v904
    %v1289 = vpack.c.b16 %v913, %v909
    %v1290 = vpack.c.b16 %v914, %v910
    %v1291 = vpack.c.b16 %v915, %v911
    %v1292 = vpack.c.b16 %v916, %v912
    %v1293 = vpack.c.b16 %v921, %v917
    %v1294 = vpack.c.b16 %v922, %v918
    %v1295 = vpack.c.b16 %v923, %v919
    %v1296 = vpack.c.b16 %v924, %v920
    %v1297 = vpack.c.b16 %v929, %v925
    %v1298 = vpack.c.b16 %v930, %v926
    %v1299 = vpack.c.b16 %v931, %v927
    %v1300 = vpack.c.b16 %v932, %v928
    %v1301 = vpack.c.b16 %v937, %v933
    %v1302 = vpack.c.b16 %v938, %v934
    %v1303 = vpack.c.b16 %v939, %v935
    %v1304 = vpack.c.b16 %v940, %v936
    %v1305 = vpack.c.b16 %v945, %v941
    %v1306 = vpack.c.b16 %v946, %v942
    %v1307 = vpack.c.b16 %v947, %v943
    %v1308 = vpack.c.b16 %v948, %v944
    %v1309 = vpack.c.b16 %v953, %v949
    %v1310 = vpack.c.b16 %v954, %v950
    %v1311 = vpack.c.b16 %v955, %v951
    %v1312 = vpack.c.b16 %v956, %v952
    %v1313 = vpack.c.b16 %v961, %v957
    %v1314 = vpack.c.b16 %v962, %v958
    %v1315 = vpack.c.b16 %v963, %v959
    %v1316 = vpack.c.b16 %v964, %v960
    %v1317 = vpack.c.b16 %v969, %v965
    %v1318 = vpack.c.b16 %v970, %v966
    %v1319 = vpack.c.b16 %v971, %v967
    %v1320 = vpack.c.b16 %v972, %v968
    %v1321 = vpack.c.b16 %v977, %v973
    %v1322 = vpack.c.b16 %v978, %v974
    %v1323 = vpack.c.b16 %v979, %v975
    %v1324 = vpack.c.b16 %v980, %v976
    %v1325 = vpack.c.b16 %v985, %v981
    %v1326 = vpack.c.b16 %v986, %v982
    %v1327 = vpack.c.b16 %v987, %v983
    %v1328 = vpack.c.b16 %v988, %v984
    %v1329 = vpack.c.b16 %v993, %v989
    %v1330 = vpack.c.b16 %v994, %v990
    %v1331 = vpack.c.b16 %v995, %v991
    %v1332 = vpack.c.b16 %v996, %v992
    %v1333 = vpack.c.b16 %v1001, %v997
    %v1334 = vpack.c.b16 %v1002, %v998
    %v1335 = vpack.c.b16 %v1003, %v999
    %v1336 = vpack.c.b16 %v1004, %v1000
    %v1337 = vpack.c.b16 %v1009, %v1005
    %v1338 = vpack.c.b16 %v1010, %v1006
    %v1339 = vpack.c.b16 %v1011, %v1007
    %v1340 = vpack.c.b16 %v1012, %v1008
    %v1341 = vpack.c.b16 %v1017, %v1013
    %v1342 = vpack.c.b16 %v1018, %v1014
    %v1343 = vpack.c.b16 %v1019, %v1015
    %v1344 = vpack.c.b16 %v1020, %v1016
    %v1345 = vpack.c.b16 %v1025, %v1021
    %v1346 = vpack.c.b16 %v1026, %v1022
    %v1347 = vpack.c.b16 %v1027, %v1023
    %v1348 = vpack.c.b16 %v1028, %v1024
    %v1349 = vpack.c.b16 %v1033, %v1029
    %v1350 = vpack.c.b16 %v1034, %v1030
    %v1351 = vpack.c.b16 %v1035, %v1031
    %v1352 = vpack.c.b16 %v1036, %v1032
    %v1353 = vpack.c.b16 %v1041, %v1037
    %v1354 = vpack.c.b16 %v1042, %v1038
    %v1355 = vpack.c.b16 %v1043, %v1039
    %v1356 = vpack.c.b16 %v1044, %v1040
    %v1357 = vpack.c.b16 %v1049, %v1045
    %v1358 = vpack.c.b16 %v1050, %v1046
    %v1359 = vpack.c.b16 %v1051, %v1047
    %v1360 = vpack.c.b16 %v1052, %v1048
    %v1361 = vpack.c.b16 %v1057, %v1053
    %v1362 = vpack.c.b16 %v1058, %v1054
    %v1363 = vpack.c.b16 %v1059, %v1055
    %v1364 = vpack.c.b16 %v1060, %v1056
    %v1365 = vpack.c.b16 %v1065, %v1061
    %v1366 = vpack.c.b16 %v1066, %v1062
    %v1367 = vpack.c.b16 %v1067, %v1063
    %v1368 = vpack.c.b16 %v1068, %v1064
    %v1369 = vpack.c.b16 %v1073, %v1069
    %v1370 = vpack.c.b16 %v1074, %v1070
    %v1371 = vpack.c.b16 %v1075, %v1071
    %v1372 = vpack.c.b16 %v1076, %v1072
    %v1373 = vpack.c.b16 %v1081, %v1077
    %v1374 = vpack.c.b16 %v1082, %v1078
    %v1375 = vpack.c.b16 %v1083, %v1079
    %v1376 = vpack.c.b16 %v1084, %v1080
    %v1377 = vpack.c.b16 %v1089, %v1085
    %v1378 = vpack.c.b16 %v1090, %v1086
    %v1379 = vpack.c.b16 %v1091, %v1087
    %v1380 = vpack.c.b16 %v1092, %v1088
    %v1381 = vpack.c.b16 %v1097, %v1093
    %v1382 = vpack.c.b16 %v1098, %v1094
    %v1383 = vpack.c.b16 %v1099, %v1095
    %v1384 = vpack.c.b16 %v1100, %v1096
    %v1385 = vpack.c.b16 %v1105, %v1101
    %v1386 = vpack.c.b16 %v1106, %v1102
    %v1387 = vpack.c.b16 %v1107, %v1103
    %v1388 = vpack.c.b16 %v1108, %v1104
    %v1389 = vpack.c.b16 %v1113, %v1109
    %v1390 = vpack.c.b16 %v1114, %v1110
    %v1391 = vpack.c.b16 %v1115, %v1111
    %v1392 = vpack.c.b16 %v1116, %v1112
    %v1393 = vpack.c.b16 %v1121, %v1117
    %v1394 = vpack.c.b16 %v1122, %v1118
    %v1395 = vpack.c.b16 %v1123, %v1119
    %v1396 = vpack.c.b16 %v1124, %v1120
    %v1397 = vpack.c.b16 %v1129, %v1125
    %v1398 = vpack.c.b16 %v1130, %v1126
    %v1399 = vpack.c.b16 %v1131, %v1127
    %v1400 = vpack.c.b16 %v1132, %v1128
    %v1401 = vpack.c.b16 %v1137, %v1133
    %v1402 = vpack.c.b16 %v1138, %v1134
    %v1403 = vpack.c.b16 %v1139, %v1135
    %v1404 = vpack.c.b16 %v1140, %v1136
    %v1405 = vpack.c.b16 %v1145, %v1141
    %v1406 = vpack.c.b16 %v1146, %v1142
    %v1407 = vpack.c.b16 %v1147, %v1143
    %v1408 = vpack.c.b16 %v1148, %v1144
    %v1409 = vpack.c.b16 %v1153, %v1149
    %v1410 = vpack.c.b16 %v1154, %v1150
    %v1411 = vpack.c.b16 %v1155, %v1151
    %v1412 = vpack.c.b16 %v1156, %v1152
    %1669 = vmatprep.subr.bf16.mxu0 %v1158
    %1670 = vmatpush1.bf16.msra.mxu0 %v1157
    %1671 = vmatprep.subr.bf16.mxu0 %v1162
    %1672 = vmatpush1.bf16.msra.mxu0 %v1161
    %1673 = vmatprep.subr.bf16.mxu0 %v1166
    %1674 = vmatpush1.bf16.msra.mxu0 %v1165
    %1675 = vmatprep.subr.bf16.mxu0 %v1170
    %1676 = vmatpush1.bf16.msra.mxu0 %v1169
    %1677 = vmatprep.subr.bf16.mxu0 %v1174
    %1678 = vmatpush1.bf16.msra.mxu0 %v1173
    %1679 = vmatprep.subr.bf16.mxu0 %v1178
    %1680 = vmatpush1.bf16.msra.mxu0 %v1177
    %1681 = vmatprep.subr.bf16.mxu0 %v1182
    %1682 = vmatpush1.bf16.msra.mxu0 %v1181
    %1683 = vmatprep.subr.bf16.mxu0 %v1186
    %1684 = vmatpush1.bf16.msra.mxu0 %v1185
    %1685 = vmatprep.subr.bf16.mxu0 %v1190
    %1686 = vmatpush1.bf16.msra.mxu0 %v1189
    %1687 = vmatprep.subr.bf16.mxu0 %v1194
    %1688 = vmatpush1.bf16.msra.mxu0 %v1193
    %1689 = vmatprep.subr.bf16.mxu0 %v1198
    %1690 = vmatpush1.bf16.msra.mxu0 %v1197
    %1691 = vmatprep.subr.bf16.mxu0 %v1202
    %1692 = vmatpush1.bf16.msra.mxu0 %v1201
    %1693 = vmatprep.subr.bf16.mxu0 %v1206
    %1694 = vmatpush1.bf16.msra.mxu0 %v1205
    %1695 = vmatprep.subr.bf16.mxu0 %v1210
    %1696 = vmatpush1.bf16.msra.mxu0 %v1209
    %1697 = vmatprep.subr.bf16.mxu0 %v1214
    %1698 = vmatpush1.bf16.msra.mxu0 %v1213
    %1699 = vmatprep.subr.bf16.mxu0 %v1218
    %1700 = vmatpush1.bf16.msra.mxu0 %v1217
    %1701 = vmatprep.mubr.bf16.mxu0 %v374
    %1702 = vmatmul.mubr.bf16.gmra.mrb[0].mxu0 %v373
    %v1703 = vpop.f32.mrb[0].mxu0
    %v1704 = vadd.f32 %v332, %v1703
    %v1705 = vpop.f32.mrb[0].mxu0
    %v1706 = vadd.f32 %v336, %v1705
    %v1707 = vpop.f32.mrb[0].mxu0
    %v1708 = vadd.f32 %v332, %v1707
    %v1709 = vpop.f32.mrb[0].mxu0
    %v1710 = vadd.f32 %v336, %v1709
    %1711 = vdwg.mxu0
    %1712 = vmatprep.subr.bf16.mxu0 %v1222
    %1713 = vmatpush1.bf16.msra.mxu0 %v1221
    %1714 = vmatprep.subr.bf16.mxu0 %v1226
    %1715 = vmatpush1.bf16.msra.mxu0 %v1225
    %1716 = vmatprep.subr.bf16.mxu0 %v1230
    %1717 = vmatpush1.bf16.msra.mxu0 %v1229
    %1718 = vmatprep.subr.bf16.mxu0 %v1234
    %1719 = vmatpush1.bf16.msra.mxu0 %v1233
    %1720 = vmatprep.subr.bf16.mxu0 %v1238
    %1721 = vmatpush1.bf16.msra.mxu0 %v1237
    %1722 = vmatprep.subr.bf16.mxu0 %v1242
    %1723 = vmatpush1.bf16.msra.mxu0 %v1241
    %1724 = vmatprep.subr.bf16.mxu0 %v1246
    %1725 = vmatpush1.bf16.msra.mxu0 %v1245
    %1726 = vmatprep.subr.bf16.mxu0 %v1250
    %1727 = vmatpush1.bf16.msra.mxu0 %v1249
    %1728 = vmatprep.subr.bf16.mxu0 %v1254
    %1729 = vmatpush1.bf16.msra.mxu0 %v1253
    %1730 = vmatprep.subr.bf16.mxu0 %v1258
    %1731 = vmatpush1.bf16.msra.mxu0 %v1257
    %1732 = vmatprep.subr.bf16.mxu0 %v1262
    %1733 = vmatpush1.bf16.msra.mxu0 %v1261
    %1734 = vmatprep.subr.bf16.mxu0 %v1266
    %1735 = vmatpush1.bf16.msra.mxu0 %v1265
    %1736 = vmatprep.subr.bf16.mxu0 %v1270
    %1737 = vmatpush1.bf16.msra.mxu0 %v1269
    %1738 = vmatprep.subr.bf16.mxu0 %v1274
    %1739 = vmatpush1.bf16.msra.mxu0 %v1273
    %1740 = vmatprep.subr.bf16.mxu0 %v1278
    %1741 = vmatpush1.bf16.msra.mxu0 %v1277
    %1742 = vmatprep.subr.bf16.mxu0 %v1282
    %1743 = vmatpush1.bf16.msra.mxu0 %v1281
    %1744 = vmatprep.mubr.bf16.mxu0 %v376
    %1745 = vmatmul.mubr.bf16.gmra.mrb[0].mxu0 %v375
    %v1746 = vpop.f32.mrb[0].mxu0
    %v1747 = vadd.f32 %v1704, %v1746
    %v1748 = vpop.f32.mrb[0].mxu0
    %v1749 = vadd.f32 %v1706, %v1748
    %v1750 = vpop.f32.mrb[0].mxu0
    %v1751 = vadd.f32 %v1708, %v1750
    %v1752 = vpop.f32.mrb[0].mxu0
    %v1753 = vadd.f32 %v1710, %v1752
    %1754 = vdwg.mxu0
    %1755 = vmatprep.subr.bf16.mxu0 %v1286
    %1756 = vmatpush1.bf16.msra.mxu0 %v1285
    %1757 = vmatprep.subr.bf16.mxu0 %v1290
    %1758 = vmatpush1.bf16.msra.mxu0 %v1289
    %1759 = vmatprep.subr.bf16.mxu0 %v1294
    %1760 = vmatpush1.bf16.msra.mxu0 %v1293
    %1761 = vmatprep.subr.bf16.mxu0 %v1298
    %1762 = vmatpush1.bf16.msra.mxu0 %v1297
    %1763 = vmatprep.subr.bf16.mxu0 %v1302
    %1764 = vmatpush1.bf16.msra.mxu0 %v1301
    %1765 = vmatprep.subr.bf16.mxu0 %v1306
    %1766 = vmatpush1.bf16.msra.mxu0 %v1305
    %1767 = vmatprep.subr.bf16.mxu0 %v1310
    %1768 = vmatpush1.bf16.msra.mxu0 %v1309
    %1769 = vmatprep.subr.bf16.mxu0 %v1314
    %1770 = vmatpush1.bf16.msra.mxu0 %v1313
    %1771 = vmatprep.subr.bf16.mxu0 %v1318
    %1772 = vmatpush1.bf16.msra.mxu0 %v1317
    %1773 = vmatprep.subr.bf16.mxu0 %v1322
    %1774 = vmatpush1.bf16.msra.mxu0 %v1321
    %1775 = vmatprep.subr.bf16.mxu0 %v1326
    %1776 = vmatpush1.bf16.msra.mxu0 %v1325
    %1777 = vmatprep.subr.bf16.mxu0 %v1330
    %1778 = vmatpush1.bf16.msra.mxu0 %v1329
    %1779 = vmatprep.subr.bf16.mxu0 %v1334
    %1780 = vmatpush1.bf16.msra.mxu0 %v1333
    %1781 = vmatprep.subr.bf16.mxu0 %v1338
    %1782 = vmatpush1.bf16.msra.mxu0 %v1337
    %1783 = vmatprep.subr.bf16.mxu0 %v1342
    %1784 = vmatpush1.bf16.msra.mxu0 %v1341
    %1785 = vmatprep.subr.bf16.mxu0 %v1346
    %1786 = vmatpush1.bf16.msra.mxu0 %v1345
    %1787 = vmatprep.mubr.bf16.mxu0 %v378
    %1788 = vmatmul.mubr.bf16.gmra.mrb[0].mxu0 %v377
    %v1789 = vpop.f32.mrb[0].mxu0
    %v1790 = vadd.f32 %v1747, %v1789
    %v1791 = vpop.f32.mrb[0].mxu0
    %v1792 = vadd.f32 %v1749, %v1791
    %v1793 = vpop.f32.mrb[0].mxu0
    %v1794 = vadd.f32 %v1751, %v1793
    %v1795 = vpop.f32.mrb[0].mxu0
    %v1796 = vadd.f32 %v1753, %v1795
    %1797 = vdwg.mxu0
    %1798 = vmatprep.subr.bf16.mxu0 %v1350
    %1799 = vmatpush1.bf16.msra.mxu0 %v1349
    %1800 = vmatprep.subr.bf16.mxu0 %v1354
    %1801 = vmatpush1.bf16.msra.mxu0 %v1353
    %1802 = vmatprep.subr.bf16.mxu0 %v1358
    %1803 = vmatpush1.bf16.msra.mxu0 %v1357
    %1804 = vmatprep.subr.bf16.mxu0 %v1362
    %1805 = vmatpush1.bf16.msra.mxu0 %v1361
    %1806 = vmatprep.subr.bf16.mxu0 %v1366
    %1807 = vmatpush1.bf16.msra.mxu0 %v1365
    %1808 = vmatprep.subr.bf16.mxu0 %v1370
    %1809 = vmatpush1.bf16.msra.mxu0 %v1369
    %1810 = vmatprep.subr.bf16.mxu0 %v1374
    %1811 = vmatpush1.bf16.msra.mxu0 %v1373
    %1812 = vmatprep.subr.bf16.mxu0 %v1378
    %1813 = vmatpush1.bf16.msra.mxu0 %v1377
    %1814 = vmatprep.subr.bf16.mxu0 %v1382
    %1815 = vmatpush1.bf16.msra.mxu0 %v1381
    %1816 = vmatprep.subr.bf16.mxu0 %v1386
    %1817 = vmatpush1.bf16.msra.mxu0 %v1385
    %1818 = vmatprep.subr.bf16.mxu0 %v1390
    %1819 = vmatpush1.bf16.msra.mxu0 %v1389
    %1820 = vmatprep.subr.bf16.mxu0 %v1394
    %1821 = vmatpush1.bf16.msra.mxu0 %v1393
    %1822 = vmatprep.subr.bf16.mxu0 %v1398
    %1823 = vmatpush1.bf16.msra.mxu0 %v1397
    %1824 = vmatprep.subr.bf16.mxu0 %v1402
    %1825 = vmatpush1.bf16.msra.mxu0 %v1401
    %1826 = vmatprep.subr.bf16.mxu0 %v1406
    %1827 = vmatpush1.bf16.msra.mxu0 %v1405
    %1828 = vmatprep.subr.bf16.mxu0 %v1410
    %1829 = vmatpush1.bf16.msra.mxu0 %v1409
    %1830 = vmatprep.mubr.bf16.mxu0 %v380
    %1831 = vmatmul.mubr.bf16.gmra.mrb[0].mxu0 %v379
    %v1832 = vpop.f32.mrb[0].mxu0
    %v1833 = vadd.f32 %v1790, %v1832
    %v1834 = vpop.f32.mrb[0].mxu0
    %v1835 = vadd.f32 %v1792, %v1834
    %v1836 = vpop.f32.mrb[0].mxu0
    %v1837 = vadd.f32 %v1794, %v1836
    %v1838 = vpop.f32.mrb[0].mxu0
    %v1839 = vadd.f32 %v1796, %v1838
    %1840 = vdwg.mxu0
    %1841 = vmatprep.subr.bf16.mxu0 %v1160
    %1842 = vmatpush1.bf16.msra.mxu0 %v1159
    %1843 = vmatprep.subr.bf16.mxu0 %v1164
    %1844 = vmatpush1.bf16.msra.mxu0 %v1163
    %1845 = vmatprep.subr.bf16.mxu0 %v1168
    %1846 = vmatpush1.bf16.msra.mxu0 %v1167
    %1847 = vmatprep.subr.bf16.mxu0 %v1172
    %1848 = vmatpush1.bf16.msra.mxu0 %v1171
    %1849 = vmatprep.subr.bf16.mxu0 %v1176
    %1850 = vmatpush1.bf16.msra.mxu0 %v1175
    %1851 = vmatprep.subr.bf16.mxu0 %v1180
    %1852 = vmatpush1.bf16.msra.mxu0 %v1179
    %1853 = vmatprep.subr.bf16.mxu0 %v1184
    %1854 = vmatpush1.bf16.msra.mxu0 %v1183
    %1855 = vmatprep.subr.bf16.mxu0 %v1188
    %1856 = vmatpush1.bf16.msra.mxu0 %v1187
    %1857 = vmatprep.subr.bf16.mxu0 %v1192
    %1858 = vmatpush1.bf16.msra.mxu0 %v1191
    %1859 = vmatprep.subr.bf16.mxu0 %v1196
    %1860 = vmatpush1.bf16.msra.mxu0 %v1195
    %1861 = vmatprep.subr.bf16.mxu0 %v1200
    %1862 = vmatpush1.bf16.msra.mxu0 %v1199
    %1863 = vmatprep.subr.bf16.mxu0 %v1204
    %1864 = vmatpush1.bf16.msra.mxu0 %v1203
    %1865 = vmatprep.subr.bf16.mxu0 %v1208
    %1866 = vmatpush1.bf16.msra.mxu0 %v1207
    %1867 = vmatprep.subr.bf16.mxu0 %v1212
    %1868 = vmatpush1.bf16.msra.mxu0 %v1211
    %1869 = vmatprep.subr.bf16.mxu0 %v1216
    %1870 = vmatpush1.bf16.msra.mxu0 %v1215
    %1871 = vmatprep.subr.bf16.mxu0 %v1220
    %1872 = vmatpush1.bf16.msra.mxu0 %v1219
    %1873 = vmatprep.mubr.bf16.mxu0 %v374
    %1874 = vmatmul.mubr.bf16.gmra.mrb[0].mxu0 %v373
    %v1875 = vpop.f32.mrb[0].mxu0
    %v1876 = vadd.f32 %v340, %v1875
    %v1877 = vpop.f32.mrb[0].mxu0
    %v1878 = vadd.f32 %v344, %v1877
    %v1879 = vpop.f32.mrb[0].mxu0
    %v1880 = vadd.f32 %v340, %v1879
    %v1881 = vpop.f32.mrb[0].mxu0
    %v1882 = vadd.f32 %v344, %v1881
    %1883 = vdwg.mxu0
    %1884 = vmatprep.subr.bf16.mxu0 %v1224
    %1885 = vmatpush1.bf16.msra.mxu0 %v1223
    %1886 = vmatprep.subr.bf16.mxu0 %v1228
    %1887 = vmatpush1.bf16.msra.mxu0 %v1227
    %1888 = vmatprep.subr.bf16.mxu0 %v1232
    %1889 = vmatpush1.bf16.msra.mxu0 %v1231
    %1890 = vmatprep.subr.bf16.mxu0 %v1236
    %1891 = vmatpush1.bf16.msra.mxu0 %v1235
    %1892 = vmatprep.subr.bf16.mxu0 %v1240
    %1893 = vmatpush1.bf16.msra.mxu0 %v1239
    %1894 = vmatprep.subr.bf16.mxu0 %v1244
    %1895 = vmatpush1.bf16.msra.mxu0 %v1243
    %1896 = vmatprep.subr.bf16.mxu0 %v1248
    %1897 = vmatpush1.bf16.msra.mxu0 %v1247
    %1898 = vmatprep.subr.bf16.mxu0 %v1252
    %1899 = vmatpush1.bf16.msra.mxu0 %v1251
    %1900 = vmatprep.subr.bf16.mxu0 %v1256
    %1901 = vmatpush1.bf16.msra.mxu0 %v1255
    %1902 = vmatprep.subr.bf16.mxu0 %v1260
    %1903 = vmatpush1.bf16.msra.mxu0 %v1259
    %1904 = vmatprep.subr.bf16.mxu0 %v1264
    %1905 = vmatpush1.bf16.msra.mxu0 %v1263
    %1906 = vmatprep.subr.bf16.mxu0 %v1268
    %1907 = vmatpush1.bf16.msra.mxu0 %v1267
    %1908 = vmatprep.subr.bf16.mxu0 %v1272
    %1909 = vmatpush1.bf16.msra.mxu0 %v1271
    %1910 = vmatprep.subr.bf16.mxu0 %v1276
    %1911 = vmatpush1.bf16.msra.mxu0 %v1275
    %1912 = vmatprep.subr.bf16.mxu0 %v1280
    %1913 = vmatpush1.bf16.msra.mxu0 %v1279
    %1914 = vmatprep.subr.bf16.mxu0 %v1284
    %1915 = vmatpush1.bf16.msra.mxu0 %v1283
    %1916 = vmatprep.mubr.bf16.mxu0 %v376
    %1917 = vmatmul.mubr.bf16.gmra.mrb[0].mxu0 %v375
    %v1918 = vpop.f32.mrb[0].mxu0
    %v1919 = vadd.f32 %v1876, %v1918
    %v1920 = vpop.f32.mrb[0].mxu0
    %v1921 = vadd.f32 %v1878, %v1920
    %v1922 = vpop.f32.mrb[0].mxu0
    %v1923 = vadd.f32 %v1880, %v1922
    %v1924 = vpop.f32.mrb[0].mxu0
    %v1925 = vadd.f32 %v1882, %v1924
    %1926 = vdwg.mxu0
    %1927 = vmatprep.subr.bf16.mxu0 %v1288
    %1928 = vmatpush1.bf16.msra.mxu0 %v1287
    %1929 = vmatprep.subr.bf16.mxu0 %v1292
    %1930 = vmatpush1.bf16.msra.mxu0 %v1291
    %1931 = vmatprep.subr.bf16.mxu0 %v1296
    %1932 = vmatpush1.bf16.msra.mxu0 %v1295
    %1933 = vmatprep.subr.bf16.mxu0 %v1300
    %1934 = vmatpush1.bf16.msra.mxu0 %v1299
    %1935 = vmatprep.subr.bf16.mxu0 %v1304
    %1936 = vmatpush1.bf16.msra.mxu0 %v1303
    %1937 = vmatprep.subr.bf16.mxu0 %v1308
    %1938 = vmatpush1.bf16.msra.mxu0 %v1307
    %1939 = vmatprep.subr.bf16.mxu0 %v1312
    %1940 = vmatpush1.bf16.msra.mxu0 %v1311
    %1941 = vmatprep.subr.bf16.mxu0 %v1316
    %1942 = vmatpush1.bf16.msra.mxu0 %v1315
    %1943 = vmatprep.subr.bf16.mxu0 %v1320
    %1944 = vmatpush1.bf16.msra.mxu0 %v1319
    %1945 = vmatprep.subr.bf16.mxu0 %v1324
    %1946 = vmatpush1.bf16.msra.mxu0 %v1323
    %1947 = vmatprep.subr.bf16.mxu0 %v1328
    %1948 = vmatpush1.bf16.msra.mxu0 %v1327
    %1949 = vmatprep.subr.bf16.mxu0 %v1332
    %1950 = vmatpush1.bf16.msra.mxu0 %v1331
    %1951 = vmatprep.subr.bf16.mxu0 %v1336
    %1952 = vmatpush1.bf16.msra.mxu0 %v1335
    %1953 = vmatprep.subr.bf16.mxu0 %v1340
    %1954 = vmatpush1.bf16.msra.mxu0 %v1339
    %1955 = vmatprep.subr.bf16.mxu0 %v1344
    %1956 = vmatpush1.bf16.msra.mxu0 %v1343
    %1957 = vmatprep.subr.bf16.mxu0 %v1348
    %1958 = vmatpush1.bf16.msra.mxu0 %v1347
    %1959 = vmatprep.mubr.bf16.mxu0 %v378
    %1960 = vmatmul.mubr.bf16.gmra.mrb[0].mxu0 %v377
    %v1961 = vpop.f32.mrb[0].mxu0
    %v1962 = vadd.f32 %v1919, %v1961
    %v1963 = vpop.f32.mrb[0].mxu0
    %v1964 = vadd.f32 %v1921, %v1963
    %v1965 = vpop.f32.mrb[0].mxu0
    %v1966 = vadd.f32 %v1923, %v1965
    %v1967 = vpop.f32.mrb[0].mxu0
    %v1968 = vadd.f32 %v1925, %v1967
    %1969 = vdwg.mxu0
    %1970 = vmatprep.subr.bf16.mxu0 %v1352
    %1971 = vmatpush1.bf16.msra.mxu0 %v1351
    %1972 = vmatprep.subr.bf16.mxu0 %v1356
    %1973 = vmatpush1.bf16.msra.mxu0 %v1355
    %1974 = vmatprep.subr.bf16.mxu0 %v1360
    %1975 = vmatpush1.bf16.msra.mxu0 %v1359
    %1976 = vmatprep.subr.bf16.mxu0 %v1364
    %1977 = vmatpush1.bf16.msra.mxu0 %v1363
    %1978 = vmatprep.subr.bf16.mxu0 %v1368
    %1979 = vmatpush1.bf16.msra.mxu0 %v1367
    %1980 = vmatprep.subr.bf16.mxu0 %v1372
    %1981 = vmatpush1.bf16.msra.mxu0 %v1371
    %1982 = vmatprep.subr.bf16.mxu0 %v1376
    %1983 = vmatpush1.bf16.msra.mxu0 %v1375
    %1984 = vmatprep.subr.bf16.mxu0 %v1380
    %1985 = vmatpush1.bf16.msra.mxu0 %v1379
    %1986 = vmatprep.subr.bf16.mxu0 %v1384
    %1987 = vmatpush1.bf16.msra.mxu0 %v1383
    %1988 = vmatprep.subr.bf16.mxu0 %v1388
    %1989 = vmatpush1.bf16.msra.mxu0 %v1387
    %1990 = vmatprep.subr.bf16.mxu0 %v1392
    %1991 = vmatpush1.bf16.msra.mxu0 %v1391
    %1992 = vmatprep.subr.bf16.mxu0 %v1396
    %1993 = vmatpush1.bf16.msra.mxu0 %v1395
    %1994 = vmatprep.subr.bf16.mxu0 %v1400
    %1995 = vmatpush1.bf16.msra.mxu0 %v1399
    %1996 = vmatprep.subr.bf16.mxu0 %v1404
    %1997 = vmatpush1.bf16.msra.mxu0 %v1403
    %1998 = vmatprep.subr.bf16.mxu0 %v1408
    %1999 = vmatpush1.bf16.msra.mxu0 %v1407
    %2000 = vmatprep.subr.bf16.mxu0 %v1412
    %2001 = vmatpush1.bf16.msra.mxu0 %v1411
    %2002 = vmatprep.mubr.bf16.mxu0 %v380
    %2003 = vmatmul.mubr.bf16.gmra.mrb[0].mxu0 %v379
    %v2004 = vpop.f32.mrb[0].mxu0
    %v2005 = vadd.f32 %v1962, %v2004
    %v2006 = vpop.f32.mrb[0].mxu0
    %v2007 = vadd.f32 %v1964, %v2006
    %v2008 = vpop.f32.mrb[0].mxu0
    %v2009 = vadd.f32 %v1966, %v2008
    %v2010 = vpop.f32.mrb[0].mxu0
    %v2011 = vadd.f32 %v1968, %v2010
    %2012 = vdwg.mxu0
    %v2013 = vmax.f32 %v1833, 0.0
    %v2014 = vmax.f32 %v1835, 0.0
    %v2015 = vmax.f32 %v2005, 0.0
    %v2016 = vmax.f32 %v2007, 0.0
    %v2017 = vmax.f32 %v1837, 0.0
    %v2018 = vmax.f32 %v1839, 0.0
    %v2019 = vmax.f32 %v2009, 0.0
    %v2020 = vmax.f32 %v2011, 0.0
    %v2021 = vpack.c.bf16 %v2017, %v2013
    %v2022 = vpack.c.bf16 %v2018, %v2014
    %v2023 = vpack.c.bf16 %v2019, %v2015
    %v2024 = vpack.c.bf16 %v2020, %v2016
    %v2025 = vld [vmem:[#allocation7] sm:$0xf]
    %v2026 = vld [vmem:[#allocation7 + $0x4] sm:$0xf]
    %v2027 = vld [vmem:[#allocation7 + $0x8] sm:$0xf]
    %v2028 = vld [vmem:[#allocation7 + $0xc] sm:$0xf]
    %v2029 = vld [vmem:[#allocation7 + $0x10] sm:$0xf]
    %v2030 = vld [vmem:[#allocation7 + $0x14] sm:$0xf]
    %v2031 = vld [vmem:[#allocation7 + $0x18] sm:$0xf]
    %v2032 = vld [vmem:[#allocation7 + $0x1c] sm:$0xf]
    %v2033 = vld [vmem:[#allocation7 + $0x20] sm:$0xf]
    %v2034 = vld [vmem:[#allocation7 + $0x24] sm:$0xf]
    %v2035 = vld [vmem:[#allocation7 + $0x28] sm:$0xf]
    %v2036 = vld [vmem:[#allocation7 + $0x2c] sm:$0xf]
    %v2037 = vld [vmem:[#allocation7 + $0x30] sm:$0xf]
    %v2038 = vld [vmem:[#allocation7 + $0x34] sm:$0xf]
    %v2039 = vld [vmem:[#allocation7 + $0x38] sm:$0xf]
    %v2040 = vld [vmem:[#allocation7 + $0x3c] sm:$0xf]
    %v2041 = vld [vmem:[#allocation7 + $0x40] sm:$0xf]
    %v2042 = vld [vmem:[#allocation7 + $0x44] sm:$0xf]
    %v2043 = vld [vmem:[#allocation7 + $0x48] sm:$0xf]
    %v2044 = vld [vmem:[#allocation7 + $0x4c] sm:$0xf]
    %v2045 = vld [vmem:[#allocation7 + $0x50] sm:$0xf]
    %v2046 = vld [vmem:[#allocation7 + $0x54] sm:$0xf]
    %v2047 = vld [vmem:[#allocation7 + $0x58] sm:$0xf]
    %v2048 = vld [vmem:[#allocation7 + $0x5c] sm:$0xf]
    %v2049 = vld [vmem:[#allocation7 + $0x60] sm:$0xf]
    %v2050 = vld [vmem:[#allocation7 + $0x64] sm:$0xf]
    %v2051 = vld [vmem:[#allocation7 + $0x68] sm:$0xf]
    %v2052 = vld [vmem:[#allocation7 + $0x6c] sm:$0xf]
    %v2053 = vld [vmem:[#allocation7 + $0x70] sm:$0xf]
    %v2054 = vld [vmem:[#allocation7 + $0x74] sm:$0xf]
    %v2055 = vld [vmem:[#allocation7 + $0x78] sm:$0xf]
    %v2056 = vld [vmem:[#allocation7 + $0x7c] sm:$0xf]
    %v2057 = vld [vmem:[#allocation7 + $0x80] sm:$0xf]
    %v2058 = vld [vmem:[#allocation7 + $0x84] sm:$0xf]
    %v2059 = vld [vmem:[#allocation7 + $0x88] sm:$0xf]
    %v2060 = vld [vmem:[#allocation7 + $0x8c] sm:$0xf]
    %v2061 = vld [vmem:[#allocation7 + $0x90] sm:$0xf]
    %v2062 = vld [vmem:[#allocation7 + $0x94] sm:$0xf]
    %v2063 = vld [vmem:[#allocation7 + $0x98] sm:$0xf]
    %v2064 = vld [vmem:[#allocation7 + $0x9c] sm:$0xf]
    %v2065 = vld [vmem:[#allocation7 + $0xa0] sm:$0xf]
    %v2066 = vld [vmem:[#allocation7 + $0xa4] sm:$0xf]
    %v2067 = vld [vmem:[#allocation7 + $0xa8] sm:$0xf]
    %v2068 = vld [vmem:[#allocation7 + $0xac] sm:$0xf]
    %v2069 = vld [vmem:[#allocation7 + $0xb0] sm:$0xf]
    %v2070 = vld [vmem:[#allocation7 + $0xb4] sm:$0xf]
    %v2071 = vld [vmem:[#allocation7 + $0xb8] sm:$0xf]
    %v2072 = vld [vmem:[#allocation7 + $0xbc] sm:$0xf]
    %v2073 = vld [vmem:[#allocation7 + $0xc0] sm:$0xf]
    %v2074 = vld [vmem:[#allocation7 + $0xc4] sm:$0xf]
    %v2075 = vld [vmem:[#allocation7 + $0xc8] sm:$0xf]
    %v2076 = vld [vmem:[#allocation7 + $0xcc] sm:$0xf]
    %v2077 = vld [vmem:[#allocation7 + $0xd0] sm:$0xf]
    %v2078 = vld [vmem:[#allocation7 + $0xd4] sm:$0xf]
    %v2079 = vld [vmem:[#allocation7 + $0xd8] sm:$0xf]
    %v2080 = vld [vmem:[#allocation7 + $0xdc] sm:$0xf]
    %v2081 = vld [vmem:[#allocation7 + $0xe0] sm:$0xf]
    %v2082 = vld [vmem:[#allocation7 + $0xe4] sm:$0xf]
    %v2083 = vld [vmem:[#allocation7 + $0xe8] sm:$0xf]
    %v2084 = vld [vmem:[#allocation7 + $0xec] sm:$0xf]
    %v2085 = vld [vmem:[#allocation7 + $0xf0] sm:$0xf]
    %v2086 = vld [vmem:[#allocation7 + $0xf4] sm:$0xf]
    %v2087 = vld [vmem:[#allocation7 + $0xf8] sm:$0xf]
    %v2088 = vld [vmem:[#allocation7 + $0xfc] sm:$0xf]
    %v2089 = vld [vmem:[%s4] sm:$0x1]
    %v2091 = vlaneseq
    %v2092 = vshrl.u32 %v2091, 7
    %v2093 = vsub.s32 0, %v2092
    %v2094 = vrot.slane %v2089, %v2093
    %v2160 = vunpack.c.l.b16 %v2025
    %v2161 = vunpack.c.l.b16 %v2026
    %v2162 = vunpack.c.l.b16 %v2027
    %v2163 = vunpack.c.l.b16 %v2028
    %v2164 = vunpack.c.l.b16 %v2029
    %v2165 = vunpack.c.l.b16 %v2030
    %v2166 = vunpack.c.l.b16 %v2031
    %v2167 = vunpack.c.l.b16 %v2032
    %v2168 = vunpack.c.l.b16 %v2033
    %v2169 = vunpack.c.l.b16 %v2034
    %v2170 = vunpack.c.l.b16 %v2035
    %v2171 = vunpack.c.l.b16 %v2036
    %v2172 = vunpack.c.l.b16 %v2037
    %v2173 = vunpack.c.l.b16 %v2038
    %v2174 = vunpack.c.l.b16 %v2039
    %v2175 = vunpack.c.l.b16 %v2040
    %v2176 = vunpack.c.l.b16 %v2041
    %v2177 = vunpack.c.l.b16 %v2042
    %v2178 = vunpack.c.l.b16 %v2043
    %v2179 = vunpack.c.l.b16 %v2044
    %v2180 = vunpack.c.l.b16 %v2045
    %v2181 = vunpack.c.l.b16 %v2046
    %v2182 = vunpack.c.l.b16 %v2047
    %v2183 = vunpack.c.l.b16 %v2048
    %v2184 = vunpack.c.l.b16 %v2049
    %v2185 = vunpack.c.l.b16 %v2050
    %v2186 = vunpack.c.l.b16 %v2051
    %v2187 = vunpack.c.l.b16 %v2052
    %v2188 = vunpack.c.l.b16 %v2053
    %v2189 = vunpack.c.l.b16 %v2054
    %v2190 = vunpack.c.l.b16 %v2055
    %v2191 = vunpack.c.l.b16 %v2056
    %v2192 = vunpack.c.l.b16 %v2057
    %v2193 = vunpack.c.l.b16 %v2058
    %v2194 = vunpack.c.l.b16 %v2059
    %v2195 = vunpack.c.l.b16 %v2060
    %v2196 = vunpack.c.l.b16 %v2061
    %v2197 = vunpack.c.l.b16 %v2062
    %v2198 = vunpack.c.l.b16 %v2063
    %v2199 = vunpack.c.l.b16 %v2064
    %v2200 = vunpack.c.l.b16 %v2065
    %v2201 = vunpack.c.l.b16 %v2066
    %v2202 = vunpack.c.l.b16 %v2067
    %v2203 = vunpack.c.l.b16 %v2068
    %v2204 = vunpack.c.l.b16 %v2069
    %v2205 = vunpack.c.l.b16 %v2070
    %v2206 = vunpack.c.l.b16 %v2071
    %v2207 = vunpack.c.l.b16 %v2072
    %v2208 = vunpack.c.l.b16 %v2073
    %v2209 = vunpack.c.l.b16 %v2074
    %v2210 = vunpack.c.l.b16 %v2075
    %v2211 = vunpack.c.l.b16 %v2076
    %v2212 = vunpack.c.l.b16 %v2077
    %v2213 = vunpack.c.l.b16 %v2078
    %v2214 = vunpack.c.l.b16 %v2079
    %v2215 = vunpack.c.l.b16 %v2080
    %v2216 = vunpack.c.l.b16 %v2081
    %v2217 = vunpack.c.l.b16 %v2082
    %v2218 = vunpack.c.l.b16 %v2083
    %v2219 = vunpack.c.l.b16 %v2084
    %v2220 = vunpack.c.l.b16 %v2085
    %v2221 = vunpack.c.l.b16 %v2086
    %v2222 = vunpack.c.l.b16 %v2087
    %v2223 = vunpack.c.l.b16 %v2088
    %v2224 = vpack.c.b16 %v2161, %v2160
    %v2225 = vpack.c.b16 %v2163, %v2162
    %v2226 = vpack.c.b16 %v2165, %v2164
    %v2227 = vpack.c.b16 %v2167, %v2166
    %v2228 = vpack.c.b16 %v2169, %v2168
    %v2229 = vpack.c.b16 %v2171, %v2170
    %v2230 = vpack.c.b16 %v2173, %v2172
    %v2231 = vpack.c.b16 %v2175, %v2174
    %v2232 = vpack.c.b16 %v2177, %v2176
    %v2233 = vpack.c.b16 %v2179, %v2178
    %v2234 = vpack.c.b16 %v2181, %v2180
    %v2235 = vpack.c.b16 %v2183, %v2182
    %v2236 = vpack.c.b16 %v2185, %v2184
    %v2237 = vpack.c.b16 %v2187, %v2186
    %v2238 = vpack.c.b16 %v2189, %v2188
    %v2239 = vpack.c.b16 %v2191, %v2190
    %v2240 = vpack.c.b16 %v2193, %v2192
    %v2241 = vpack.c.b16 %v2195, %v2194
    %v2242 = vpack.c.b16 %v2197, %v2196
    %v2243 = vpack.c.b16 %v2199, %v2198
    %v2244 = vpack.c.b16 %v2201, %v2200
    %v2245 = vpack.c.b16 %v2203, %v2202
    %v2246 = vpack.c.b16 %v2205, %v2204
    %v2247 = vpack.c.b16 %v2207, %v2206
    %v2248 = vpack.c.b16 %v2209, %v2208
    %v2249 = vpack.c.b16 %v2211, %v2210
    %v2250 = vpack.c.b16 %v2213, %v2212
    %v2251 = vpack.c.b16 %v2215, %v2214
    %v2252 = vpack.c.b16 %v2217, %v2216
    %v2253 = vpack.c.b16 %v2219, %v2218
    %v2254 = vpack.c.b16 %v2221, %v2220
    %v2255 = vpack.c.b16 %v2223, %v2222
    %2288 = vmatprep.subr.bf16.mxu0 0
    %2289 = vmatpush1.bf16.msra.mxu0 %v2224
    %2290 = vmatprep.subr.bf16.mxu0 0
    %2291 = vmatpush1.bf16.msra.mxu0 %v2225
    %2292 = vmatprep.subr.bf16.mxu0 0
    %2293 = vmatpush1.bf16.msra.mxu0 %v2226
    %2294 = vmatprep.subr.bf16.mxu0 0
    %2295 = vmatpush1.bf16.msra.mxu0 %v2227
    %2296 = vmatprep.subr.bf16.mxu0 0
    %2297 = vmatpush1.bf16.msra.mxu0 %v2228
    %2298 = vmatprep.subr.bf16.mxu0 0
    %2299 = vmatpush1.bf16.msra.mxu0 %v2229
    %2300 = vmatprep.subr.bf16.mxu0 0
    %2301 = vmatpush1.bf16.msra.mxu0 %v2230
    %2302 = vmatprep.subr.bf16.mxu0 0
    %2303 = vmatpush1.bf16.msra.mxu0 %v2231
    %2304 = vmatprep.subr.bf16.mxu0 0
    %2305 = vmatpush1.bf16.msra.mxu0 %v2232
    %2306 = vmatprep.subr.bf16.mxu0 0
    %2307 = vmatpush1.bf16.msra.mxu0 %v2233
    %2308 = vmatprep.subr.bf16.mxu0 0
    %2309 = vmatpush1.bf16.msra.mxu0 %v2234
    %2310 = vmatprep.subr.bf16.mxu0 0
    %2311 = vmatpush1.bf16.msra.mxu0 %v2235
    %2312 = vmatprep.subr.bf16.mxu0 0
    %2313 = vmatpush1.bf16.msra.mxu0 %v2236
    %2314 = vmatprep.subr.bf16.mxu0 0
    %2315 = vmatpush1.bf16.msra.mxu0 %v2237
    %2316 = vmatprep.subr.bf16.mxu0 0
    %2317 = vmatpush1.bf16.msra.mxu0 %v2238
    %2318 = vmatprep.subr.bf16.mxu0 0
    %2319 = vmatpush1.bf16.msra.mxu0 %v2239
    %2320 = vmatprep.mubr.bf16.mxu0 %v2022
    %2321 = vmatmul.mubr.bf16.gmra.mrb[0].mxu0 %v2021
    %v2322 = vpop.f32.mrb[0].mxu0
    %v2323 = vadd.f32 %v2094, %v2322
    %v2324 = vpop.f32.mrb[0].mxu0
    %v2325 = vpop.f32.mrb[0].mxu0
    %v2326 = vadd.f32 %v2094, %v2325
    %v2327 = vpop.f32.mrb[0].mxu0
    %2328 = vdwg.mxu0
    %2329 = vmatprep.subr.bf16.mxu0 0
    %2330 = vmatpush1.bf16.msra.mxu0 %v2240
    %2331 = vmatprep.subr.bf16.mxu0 0
    %2332 = vmatpush1.bf16.msra.mxu0 %v2241
    %2333 = vmatprep.subr.bf16.mxu0 0
    %2334 = vmatpush1.bf16.msra.mxu0 %v2242
    %2335 = vmatprep.subr.bf16.mxu0 0
    %2336 = vmatpush1.bf16.msra.mxu0 %v2243
    %2337 = vmatprep.subr.bf16.mxu0 0
    %2338 = vmatpush1.bf16.msra.mxu0 %v2244
    %2339 = vmatprep.subr.bf16.mxu0 0
    %2340 = vmatpush1.bf16.msra.mxu0 %v2245
    %2341 = vmatprep.subr.bf16.mxu0 0
    %2342 = vmatpush1.bf16.msra.mxu0 %v2246
    %2343 = vmatprep.subr.bf16.mxu0 0
    %2344 = vmatpush1.bf16.msra.mxu0 %v2247
    %2345 = vmatprep.subr.bf16.mxu0 0
    %2346 = vmatpush1.bf16.msra.mxu0 %v2248
    %2347 = vmatprep.subr.bf16.mxu0 0
    %2348 = vmatpush1.bf16.msra.mxu0 %v2249
    %2349 = vmatprep.subr.bf16.mxu0 0
    %2350 = vmatpush1.bf16.msra.mxu0 %v2250
    %2351 = vmatprep.subr.bf16.mxu0 0
    %2352 = vmatpush1.bf16.msra.mxu0 %v2251
    %2353 = vmatprep.subr.bf16.mxu0 0
    %2354 = vmatpush1.bf16.msra.mxu0 %v2252
    %2355 = vmatprep.subr.bf16.mxu0 0
    %2356 = vmatpush1.bf16.msra.mxu0 %v2253
    %2357 = vmatprep.subr.bf16.mxu0 0
    %2358 = vmatpush1.bf16.msra.mxu0 %v2254
    %2359 = vmatprep.subr.bf16.mxu0 0
    %2360 = vmatpush1.bf16.msra.mxu0 %v2255
    %2361 = vmatprep.mubr.bf16.mxu0 %v2024
    %2362 = vmatmul.mubr.bf16.gmra.mrb[0].mxu0 %v2023
    %v2363 = vpop.f32.mrb[0].mxu0
    %v2364 = vadd.f32 %v2323, %v2363
    %v2365 = vpop.f32.mrb[0].mxu0
    %v2366 = vpop.f32.mrb[0].mxu0
    %v2367 = vadd.f32 %v2326, %v2366
    %v2368 = vpop.f32.mrb[0].mxu0
    %2369 = vdwg.mxu0
    %2370 = vmax.xlane.f32.xlu0 %v2364
    %v2371 = vpop.xlane.xlu0 %2370
    %2372 = vmax.xlane.f32.xlu0 %v2367
    %v2373 = vpop.xlane.xlu0 %2372
    %v2374 = vsub.f32 %v2364, %v2371
    %v2375 = vsub.f32 %v2367, %v2373
    %v2376 = vmul.f32 %v2374, 1.442695
    %v2377 = vpow.pop %v2376
    %v2378 = vmul.f32 %v2375, 1.442695
    %v2379 = vpow.pop %v2378
    %2380 = vadd.xlane.f32.xlu0 %v2377
    %v2381 = vpop.xlane.xlu0 %2380
    %2382 = vadd.xlane.f32.xlu0 %v2379
    %v2383 = vpop.xlane.xlu0 %2382
    %v2384 = vrcp.pop %v2381
    %v2385 = vmul.f32 %v2377, %v2384
    %v2386 = vrcp.pop %v2383
    %v2387 = vmul.f32 %v2379, %v2386
    %2388 = vst [vmem:[#allocation8] sm:$0xff] %v2385
    %2389 = vst [vmem:[#allocation8 + $0x8] sm:$0xff] %v2387
    // Predicated region
    $region34: #{tpu_custom_call.1} parent=1 // pred_check
      _
    $region35: #{tpu_custom_call.1} parent=1 // pred_check_branch
      %2391 = sbr.rel (0) target = $region37
    $region36: #{tpu_custom_call.1} parent=1 // pred_region
      %s2393 = ssub.s32 256, 256
      %2394 = vsyncadd [#allocation4], %s2393
      %s2395 = sshll.u32 [#allocation8], 4
      %s2396 = int_to_ptr.vmem [resolvable:$true] %s2395
      %2401 = dma.vmem_to_hbm [thread:$0]  %s2396, 256, %s5, [#allocation4], 128, 128, 8
    $region37: #{tpu_custom_call.1} parent=1 // pred_fallthru
      _
    // Predicated region
    $region38: #{tpu_custom_call.1} parent=1 // pred_check
      _
    $region39: #{tpu_custom_call.1} parent=1 // pred_check_branch
      %2403 = sbr.rel (0) target = $region41
    $region40: #{tpu_custom_call.1} parent=1 // pred_region
      %2404 = dma.done [#allocation4], 256
    $region41: #{tpu_custom_call.1} parent=1 // pred_fallthru
      _
    %2405 = vsyncpa [#allocation3], 1
    %2406 = vsyncpa [#allocation6], 1
    %2407 = vsyncpa [#allocation4], 1

</llo_original>
